<compile_context>
chip_gen: v6e
topology: v6e:2x2x1
jax: 0.10.0
libtpu: 0.0.40
codegen_flags: <defaults>
</compile_context>

<pallas_src>
import jax
import jax.numpy as jnp
from jax.experimental import pallas as pl
from jax.experimental.pallas import tpu as pltpu


def adj_decoder_kernel(
    parent_ref,            # [TB, F_pad]   (matmul dtype)
    le_ref,                # [TB, Fe_pad]  (matmul dtype)
    re_ref,                # [TB, Fe_pad]  (matmul dtype)
    wm_ref, bm_ref,        # mlp:              [F_pad, H_pad], [1, H_pad] f32
    wle_ref, ble_ref,      # mlp_left_encode:  [Fe_pad, H_pad], [1, H_pad] f32
    wl_ref, bl2_ref,       # mlp_left:         [H_pad, F_pad], [1, F_pad] f32  (bl2 = 2*bl)
    wr_ref, br2_ref,       # mlp_right:        [H_pad, F_pad], [1, F_pad] f32  (br2 = 2*br)
    out_ref,               # [TB, 2*F_pad]  (left | right, lane-dense)
):
    f_pad = wl_ref.shape[1]
    cdt = wm_ref.dtype     # matmul operand dtype (bf16 on the fast path, f32 otherwise)

    # vector = tanh(mlp(parent)): MXU dot in cdt, f32 accumulation, f32 bias + tanh.
    vector = jnp.tanh(
        jnp.dot(parent_ref[...], wm_ref[...], preferred_element_type=jnp.float32)
        + bm_ref[...])

    # Both encodings go through mlp_left_encode (shared weights). The weights stay
    # resident; the two activation dots pipeline behind the batch-tile DMAs.
    v_left = jnp.tanh(
        jnp.dot(le_ref[...], wle_ref[...], preferred_element_type=jnp.float32)
        + ble_ref[...])
    v_right = jnp.tanh(
        jnp.dot(re_ref[...], wle_ref[...], preferred_element_type=jnp.float32)
        + ble_ref[...])

    # mlp_left(v) + mlp_left(vl) == (v + vl) @ Wl + 2*bl   (2*bias folded in the wrapper).
    left = jnp.tanh(
        jnp.dot((vector + v_left).astype(cdt), wl_ref[...],
                preferred_element_type=jnp.float32) + bl2_ref[...])
    right = jnp.tanh(
        jnp.dot((vector + v_right).astype(cdt), wr_ref[...],
                preferred_element_type=jnp.float32) + br2_ref[...])

    # Lane-aligned (multiple-of-128) stores into one packed output slab.
    out_ref[:, :f_pad] = left.astype(out_ref.dtype)
    out_ref[:, f_pad:] = right.astype(out_ref.dtype)


def _round_up(x, m):
    return (x + m - 1) // m * m


def _vmem_limit_bytes():
    """Per-generation scoped-VMEM limit with headroom for Mosaic internal scratch."""
    cap = 128 * 1024 * 1024                      # v5e/v6e physical VMEM per TensorCore
    try:
        info = pltpu.get_tpu_info()
        cap = int(getattr(info, "vmem_capacity_bytes", cap))
    except Exception:
        pass
    # Leave ~1/8 headroom (≈56 MiB on v7x's 64 MiB); never request more than 100 MiB.
    return min(cap - cap // 8, 100 * 1024 * 1024)


def _const_spec(shape, single_buffer):
    """Grid-invariant operand (weights/biases): constant index_map -> stays resident."""
    ndim = len(shape)
    index_map = lambda i: (0,) * ndim
    if single_buffer:
        return pl.BlockSpec(shape, index_map, memory_space=pltpu.VMEM,
                            pipeline_mode=pl.Buffered(1))
    return pl.BlockSpec(shape, index_map, memory_space=pltpu.VMEM)


def adj_decoder_forward(parent, left_enc, right_enc, params, *, tile_b=None,
                        matmul_dtype=jnp.bfloat16):
    """params: dict with PyTorch-convention weights (out_features, in_features)."""
    B, F = parent.shape
    H = params["mlp_w"].shape[0]
    Fe = F + 6  # the `[:, 0:1006]` slice (== [:, :F+6] at the intended feature_size=1000)
    assert left_enc.shape[1] >= Fe and right_enc.shape[1] >= Fe

    # --- pad everything to MXU/VPU-friendly shapes (multiples of 128 on lane dims) ---
    F_pad = _round_up(F, 128)
    Fe_pad = _round_up(Fe, 128)
    H_pad = _round_up(H, 128)

    if tile_b is None:
        if B >= 512:
            tile_b = 256          # fills the 256-wide MXU on v6e/v7x, still G >= 2
        elif B >= 256:
            tile_b = 128          # keep G >= 2 so v7x shards tiles over both TCs
        else:
            tile_b = _round_up(B, 8)
    B_pad = _round_up(B, tile_b)
    G = B_pad // tile_b
    out_dtype = parent.dtype

    def pad2(x, rows, cols):
        return jnp.pad(x, ((0, rows - x.shape[0]), (0, cols - x.shape[1])))

    # Activations: pad, cast to the matmul dtype (bf16 fast path).
    parent_p = pad2(parent, B_pad, F_pad).astype(matmul_dtype)
    le_p = pad2(left_enc[:, :Fe], B_pad, Fe_pad).astype(matmul_dtype)
    re_p = pad2(right_enc[:, :Fe], B_pad, Fe_pad).astype(matmul_dtype)

    # Weights: transpose to [in, out], zero-pad, cast. Biases stay f32 as [1, out] rows.
    wm = pad2(params["mlp_w"].T, F_pad, H_pad).astype(matmul_dtype)
    bm = jnp.pad(params["mlp_b"], (0, H_pad - H)).astype(jnp.float32)[None, :]
    wle = pad2(params["mlp_left_encode_w"].T, Fe_pad, H_pad).astype(matmul_dtype)
    ble = jnp.pad(params["mlp_left_encode_b"], (0, H_pad - H)).astype(jnp.float32)[None, :]
    wl = pad2(params["mlp_left_w"].T, H_pad, F_pad).astype(matmul_dtype)
    bl2 = (2.0 * jnp.pad(params["mlp_left_b"], (0, F_pad - F))).astype(jnp.float32)[None, :]
    wr = pad2(params["mlp_right_w"].T, H_pad, F_pad).astype(matmul_dtype)
    br2 = (2.0 * jnp.pad(params["mlp_right_b"], (0, F_pad - F))).astype(jnp.float32)[None, :]

    consts = (wm, bm, wle, ble, wl, bl2, wr, br2)
    args = (parent_p, le_p, re_p) + consts

    # Advisory cost estimate so XLA schedules the surrounding pad/slice ops sensibly.
    flops = 2 * B_pad * H_pad * (F_pad + 2 * Fe_pad) + 4 * B_pad * H_pad * F_pad
    transcendentals = B_pad * (3 * H_pad + 2 * F_pad)
    bytes_accessed = (sum(int(a.size) * a.dtype.itemsize for a in args)
                      + B_pad * 2 * F_pad * jnp.dtype(out_dtype).itemsize)

    def run(single_buffer_weights):
        in_specs = [
            pl.BlockSpec((tile_b, F_pad), lambda i: (i, 0), memory_space=pltpu.VMEM),
            pl.BlockSpec((tile_b, Fe_pad), lambda i: (i, 0), memory_space=pltpu.VMEM),
            pl.BlockSpec((tile_b, Fe_pad), lambda i: (i, 0), memory_space=pltpu.VMEM),
        ] + [_const_spec(c.shape, single_buffer_weights) for c in consts]

        return pl.pallas_call(
            adj_decoder_kernel,
            out_shape=jax.ShapeDtypeStruct((B_pad, 2 * F_pad), out_dtype),
            grid=(G,),
            in_specs=in_specs,
            out_specs=pl.BlockSpec((tile_b, 2 * F_pad), lambda i: (i, 0),
                                   memory_space=pltpu.VMEM),
            compiler_params=pltpu.CompilerParams(
                dimension_semantics=("parallel",),      # shard batch tiles over v7x's 2 TCs
                vmem_limit_bytes=_vmem_limit_bytes(),
            ),
            cost_estimate=pl.CostEstimate(flops=flops,
                                          transcendentals=transcendentals,
                                          bytes_accessed=bytes_accessed),
        )(*args)

    try:
        out = run(True)
    except Exception:
        # TODO(synk): pl.Buffered(1) single-buffering of grid-invariant weights not
        # supported on this jax version; fall back to default double-buffering.
        out = run(False)

    left = out[:B, :F]
    right = out[:B, F_pad:F_pad + F]
    return left, right


def reference_forward(parent, left_enc, right_enc, params):
    """Plain-JAX reference mirroring the PyTorch module exactly."""
    F = parent.shape[1]
    lin = lambda x, w, b: x @ w.T + b
    vector = jnp.tanh(lin(parent, params["mlp_w"], params["mlp_b"]))
    vl = jnp.tanh(lin(left_enc[:, : F + 6], params["mlp_left_encode_w"],
                      params["mlp_left_encode_b"]))
    vr = jnp.tanh(lin(right_enc[:, : F + 6], params["mlp_left_encode_w"],
                      params["mlp_left_encode_b"]))
    left = jnp.tanh(lin(vector, params["mlp_left_w"], params["mlp_left_b"])
                    + lin(vl, params["mlp_left_w"], params["mlp_left_b"]))
    right = jnp.tanh(lin(vector, params["mlp_right_w"], params["mlp_right_b"])
                     + lin(vr, params["mlp_right_w"], params["mlp_right_b"]))
    return left, right


def init_params(key, feature_size, hidden_size):
    """Deterministic init mimicking nn.Linear default U(-1/sqrt(fan_in), +)."""
    def linear(k, out_f, in_f):
        kw, kb = jax.random.split(k)
        bound = 1.0 / (in_f ** 0.5)
        w = jax.random.uniform(kw, (out_f, in_f), jnp.float32, -bound, bound)
        b = jax.random.uniform(kb, (out_f,), jnp.float32, -bound, bound)
        return w, b

    k1, k2, k3, k4 = jax.random.split(key, 4)
    p = {}
    p["mlp_w"], p["mlp_b"] = linear(k1, hidden_size, feature_size)
    p["mlp_left_encode_w"], p["mlp_left_encode_b"] = linear(
        k2, hidden_size, feature_size + 6)
    p["mlp_left_w"], p["mlp_left_b"] = linear(k3, feature_size, hidden_size)
    p["mlp_right_w"], p["mlp_right_b"] = linear(k4, feature_size, hidden_size)
    return p


if __name__ == "__main__":
    B = 8            # batch
    FEATURE = 32     # feature_size
    HIDDEN = 64      # hidden_size

    key = jax.random.PRNGKey(0)
    kp, kl, kr, kparams = jax.random.split(key, 4)

    parent = jax.random.normal(kp, (B, FEATURE), jnp.float32)
    left_enc = jax.random.normal(kl, (B, FEATURE + 6), jnp.float32)
    right_enc = jax.random.normal(kr, (B, FEATURE + 6), jnp.float32)
    params = init_params(kparams, FEATURE, HIDDEN)

    ref_left, ref_right = reference_forward(parent, left_enc, right_enc, params)

    # Fast path: bf16 matmul operands, f32 accumulation / bias / tanh.
    left, right = adj_decoder_forward(parent, left_enc, right_enc, params)
    jax.block_until_ready((left, right))
    assert jnp.allclose(left, ref_left, atol=2e-2, rtol=2e-2)
    assert jnp.allclose(right, ref_right, atol=2e-2, rtol=2e-2)

    # Exact-math path (f32 matmul operands) validated tightly.
    left32, right32 = adj_decoder_forward(parent, left_enc, right_enc, params,
                                          matmul_dtype=jnp.float32)
    jax.block_until_ready((left32, right32))
    assert jnp.allclose(left32, ref_left, atol=1e-5, rtol=1e-5)
    assert jnp.allclose(right32, ref_right, atol=1e-5, rtol=1e-5)

    print("KERNEL_OK")
</pallas_src>

<mosaic_0001>
module attributes {stable_mosaic.version = 11 : i64} {
  func.func @adj_decoder_kernel(%arg0: i32, %arg1: memref<8x128xbf16, #tpu.memory_space<vmem>>, %arg2: memref<8x128xbf16, #tpu.memory_space<vmem>>, %arg3: memref<8x128xbf16, #tpu.memory_space<vmem>>, %arg4: memref<128x128xbf16, #tpu.memory_space<vmem>>, %arg5: memref<1x128xf32, #tpu.memory_space<vmem>>, %arg6: memref<128x128xbf16, #tpu.memory_space<vmem>>, %arg7: memref<1x128xf32, #tpu.memory_space<vmem>>, %arg8: memref<128x128xbf16, #tpu.memory_space<vmem>>, %arg9: memref<1x128xf32, #tpu.memory_space<vmem>>, %arg10: memref<128x128xbf16, #tpu.memory_space<vmem>>, %arg11: memref<1x128xf32, #tpu.memory_space<vmem>>, %arg12: memref<8x256xf32, #tpu.memory_space<vmem>>) attributes {dimension_semantics = [#tpu.dimension_semantics<parallel>], iteration_bounds = array<i64: 1>, scalar_prefetch = 0 : i64, scratch_operands = 0 : i64, tpu.core_type = #tpu.core_type<tc>, window_params = [{transform_indices = @transform_0, window_bounds = array<i64: 8, 128>}, {transform_indices = @transform_1, window_bounds = array<i64: 8, 128>}, {transform_indices = @transform_2, window_bounds = array<i64: 8, 128>}, {pipeline_mode = #tpu.pipeline_mode<synchronous>, transform_indices = @transform_3, window_bounds = array<i64: 128, 128>}, {pipeline_mode = #tpu.pipeline_mode<synchronous>, transform_indices = @transform_4, window_bounds = array<i64: 1, 128>}, {pipeline_mode = #tpu.pipeline_mode<synchronous>, transform_indices = @transform_5, window_bounds = array<i64: 128, 128>}, {pipeline_mode = #tpu.pipeline_mode<synchronous>, transform_indices = @transform_6, window_bounds = array<i64: 1, 128>}, {pipeline_mode = #tpu.pipeline_mode<synchronous>, transform_indices = @transform_7, window_bounds = array<i64: 128, 128>}, {pipeline_mode = #tpu.pipeline_mode<synchronous>, transform_indices = @transform_8, window_bounds = array<i64: 1, 128>}, {pipeline_mode = #tpu.pipeline_mode<synchronous>, transform_indices = @transform_9, window_bounds = array<i64: 128, 128>}, {pipeline_mode = #tpu.pipeline_mode<synchronous>, transform_indices = @transform_10, window_bounds = array<i64: 1, 128>}, {transform_indices = @transform_11, window_bounds = array<i64: 8, 256>}]} {
    %c0 = arith.constant 0 : index
    %c0_0 = arith.constant 0 : index
    %0 = vector.load %arg1[%c0, %c0_0] : memref<8x128xbf16, #tpu.memory_space<vmem>>, vector<8x128xbf16>
    %c0_1 = arith.constant 0 : index
    %c0_2 = arith.constant 0 : index
    %1 = vector.load %arg4[%c0_1, %c0_2] : memref<128x128xbf16, #tpu.memory_space<vmem>>, vector<128x128xbf16>
    %cst = arith.constant dense<0.000000e+00> : vector<8x128xf32>
    %2 = tpu.matmul %0, %1, %cst {dimension_numbers = #tpu.dot_dimension_numbers<[1], [0], [0], [1], [0, 0, 1, 1], [], []>} : vector<8x128xbf16>, vector<128x128xbf16>, vector<8x128xf32> -> vector<8x128xf32>
    %c0_3 = arith.constant 0 : index
    %c0_4 = arith.constant 0 : index
    %3 = vector.load %arg5[%c0_3, %c0_4] : memref<1x128xf32, #tpu.memory_space<vmem>>, vector<1x128xf32>
    %4 = vector.broadcast %3 : vector<1x128xf32> to vector<8x128xf32>
    %5 = arith.addf %2, %4 : vector<8x128xf32>
    %6 = math.tanh %5 : vector<8x128xf32>
    %c0_5 = arith.constant 0 : index
    %c0_6 = arith.constant 0 : index
    %7 = vector.load %arg2[%c0_5, %c0_6] : memref<8x128xbf16, #tpu.memory_space<vmem>>, vector<8x128xbf16>
    %c0_7 = arith.constant 0 : index
    %c0_8 = arith.constant 0 : index
    %8 = vector.load %arg6[%c0_7, %c0_8] : memref<128x128xbf16, #tpu.memory_space<vmem>>, vector<128x128xbf16>
    %cst_9 = arith.constant dense<0.000000e+00> : vector<8x128xf32>
    %9 = tpu.matmul %7, %8, %cst_9 {dimension_numbers = #tpu.dot_dimension_numbers<[1], [0], [0], [1], [0, 0, 1, 1], [], []>} : vector<8x128xbf16>, vector<128x128xbf16>, vector<8x128xf32> -> vector<8x128xf32>
    %c0_10 = arith.constant 0 : index
    %c0_11 = arith.constant 0 : index
    %10 = vector.load %arg7[%c0_10, %c0_11] : memref<1x128xf32, #tpu.memory_space<vmem>>, vector<1x128xf32>
    %11 = vector.broadcast %10 : vector<1x128xf32> to vector<8x128xf32>
    %12 = arith.addf %9, %11 : vector<8x128xf32>
    %13 = math.tanh %12 : vector<8x128xf32>
    %c0_12 = arith.constant 0 : index
    %c0_13 = arith.constant 0 : index
    %14 = vector.load %arg3[%c0_12, %c0_13] : memref<8x128xbf16, #tpu.memory_space<vmem>>, vector<8x128xbf16>
    %c0_14 = arith.constant 0 : index
    %c0_15 = arith.constant 0 : index
    %15 = vector.load %arg6[%c0_14, %c0_15] : memref<128x128xbf16, #tpu.memory_space<vmem>>, vector<128x128xbf16>
    %cst_16 = arith.constant dense<0.000000e+00> : vector<8x128xf32>
    %16 = tpu.matmul %14, %15, %cst_16 {dimension_numbers = #tpu.dot_dimension_numbers<[1], [0], [0], [1], [0, 0, 1, 1], [], []>} : vector<8x128xbf16>, vector<128x128xbf16>, vector<8x128xf32> -> vector<8x128xf32>
    %c0_17 = arith.constant 0 : index
    %c0_18 = arith.constant 0 : index
    %17 = vector.load %arg7[%c0_17, %c0_18] : memref<1x128xf32, #tpu.memory_space<vmem>>, vector<1x128xf32>
    %18 = vector.broadcast %17 : vector<1x128xf32> to vector<8x128xf32>
    %19 = arith.addf %16, %18 : vector<8x128xf32>
    %20 = math.tanh %19 : vector<8x128xf32>
    %21 = arith.addf %6, %13 : vector<8x128xf32>
    %22 = arith.truncf %21 : vector<8x128xf32> to vector<8x128xbf16>
    %c0_19 = arith.constant 0 : index
    %c0_20 = arith.constant 0 : index
    %23 = vector.load %arg8[%c0_19, %c0_20] : memref<128x128xbf16, #tpu.memory_space<vmem>>, vector<128x128xbf16>
    %cst_21 = arith.constant dense<0.000000e+00> : vector<8x128xf32>
    %24 = tpu.matmul %22, %23, %cst_21 {dimension_numbers = #tpu.dot_dimension_numbers<[1], [0], [0], [1], [0, 0, 1, 1], [], []>} : vector<8x128xbf16>, vector<128x128xbf16>, vector<8x128xf32> -> vector<8x128xf32>
    %c0_22 = arith.constant 0 : index
    %c0_23 = arith.constant 0 : index
    %25 = vector.load %arg9[%c0_22, %c0_23] : memref<1x128xf32, #tpu.memory_space<vmem>>, vector<1x128xf32>
    %26 = vector.broadcast %25 : vector<1x128xf32> to vector<8x128xf32>
    %27 = arith.addf %24, %26 : vector<8x128xf32>
    %28 = math.tanh %27 : vector<8x128xf32>
    %29 = arith.addf %6, %20 : vector<8x128xf32>
    %30 = arith.truncf %29 : vector<8x128xf32> to vector<8x128xbf16>
    %c0_24 = arith.constant 0 : index
    %c0_25 = arith.constant 0 : index
    %31 = vector.load %arg10[%c0_24, %c0_25] : memref<128x128xbf16, #tpu.memory_space<vmem>>, vector<128x128xbf16>
    %cst_26 = arith.constant dense<0.000000e+00> : vector<8x128xf32>
    %32 = tpu.matmul %30, %31, %cst_26 {dimension_numbers = #tpu.dot_dimension_numbers<[1], [0], [0], [1], [0, 0, 1, 1], [], []>} : vector<8x128xbf16>, vector<128x128xbf16>, vector<8x128xf32> -> vector<8x128xf32>
    %c0_27 = arith.constant 0 : index
    %c0_28 = arith.constant 0 : index
    %33 = vector.load %arg11[%c0_27, %c0_28] : memref<1x128xf32, #tpu.memory_space<vmem>>, vector<1x128xf32>
    %34 = vector.broadcast %33 : vector<1x128xf32> to vector<8x128xf32>
    %35 = arith.addf %32, %34 : vector<8x128xf32>
    %36 = math.tanh %35 : vector<8x128xf32>
    %c0_29 = arith.constant 0 : index
    %c0_30 = arith.constant 0 : index
    %37 = vector.load %arg12[%c0_29, %c0_30] : memref<8x256xf32, #tpu.memory_space<vmem>>, vector<8x128xf32>
    tpu.vector_store %arg12[%c0_29, %c0_30], %28 {strides = array<i32>} : memref<8x256xf32, #tpu.memory_space<vmem>>, vector<8x128xf32>,
    %c0_31 = arith.constant 0 : index
    %c128 = arith.constant 128 : index
    %38 = vector.load %arg12[%c0_31, %c128] : memref<8x256xf32, #tpu.memory_space<vmem>>, vector<8x128xf32>
    tpu.vector_store %arg12[%c0_31, %c128], %36 {strides = array<i32>} : memref<8x256xf32, #tpu.memory_space<vmem>>, vector<8x128xf32>,
    return
  }
  func.func @transform_0(%arg0: i32) -> (i32, i32) {
    %c0_i32 = arith.constant 0 : i32
    %c0_i32_0 = arith.constant 0 : i32
    return %arg0, %c0_i32 : i32, i32
  }
  func.func @transform_1(%arg0: i32) -> (i32, i32) {
    %c0_i32 = arith.constant 0 : i32
    %c0_i32_0 = arith.constant 0 : i32
    return %arg0, %c0_i32 : i32, i32
  }
  func.func @transform_2(%arg0: i32) -> (i32, i32) {
    %c0_i32 = arith.constant 0 : i32
    %c0_i32_0 = arith.constant 0 : i32
    return %arg0, %c0_i32 : i32, i32
  }
  func.func @transform_3(%arg0: i32) -> (i32, i32) {
    %c0_i32 = arith.constant 0 : i32
    %c0_i32_0 = arith.constant 0 : i32
    %c0_i32_1 = arith.constant 0 : i32
    return %c0_i32, %c0_i32_0 : i32, i32
  }
  func.func @transform_4(%arg0: i32) -> (i32, i32) {
    %c0_i32 = arith.constant 0 : i32
    %c0_i32_0 = arith.constant 0 : i32
    %c0_i32_1 = arith.constant 0 : i32
    return %c0_i32, %c0_i32_0 : i32, i32
  }
  func.func @transform_5(%arg0: i32) -> (i32, i32) {
    %c0_i32 = arith.constant 0 : i32
    %c0_i32_0 = arith.constant 0 : i32
    %c0_i32_1 = arith.constant 0 : i32
    return %c0_i32, %c0_i32_0 : i32, i32
  }
  func.func @transform_6(%arg0: i32) -> (i32, i32) {
    %c0_i32 = arith.constant 0 : i32
    %c0_i32_0 = arith.constant 0 : i32
    %c0_i32_1 = arith.constant 0 : i32
    return %c0_i32, %c0_i32_0 : i32, i32
  }
  func.func @transform_7(%arg0: i32) -> (i32, i32) {
    %c0_i32 = arith.constant 0 : i32
    %c0_i32_0 = arith.constant 0 : i32
    %c0_i32_1 = arith.constant 0 : i32
    return %c0_i32, %c0_i32_0 : i32, i32
  }
  func.func @transform_8(%arg0: i32) -> (i32, i32) {
    %c0_i32 = arith.constant 0 : i32
    %c0_i32_0 = arith.constant 0 : i32
    %c0_i32_1 = arith.constant 0 : i32
    return %c0_i32, %c0_i32_0 : i32, i32
  }
  func.func @transform_9(%arg0: i32) -> (i32, i32) {
    %c0_i32 = arith.constant 0 : i32
    %c0_i32_0 = arith.constant 0 : i32
    %c0_i32_1 = arith.constant 0 : i32
    return %c0_i32, %c0_i32_0 : i32, i32
  }
  func.func @transform_10(%arg0: i32) -> (i32, i32) {
    %c0_i32 = arith.constant 0 : i32
    %c0_i32_0 = arith.constant 0 : i32
    %c0_i32_1 = arith.constant 0 : i32
    return %c0_i32, %c0_i32_0 : i32, i32
  }
  func.func @transform_11(%arg0: i32) -> (i32, i32) {
    %c0_i32 = arith.constant 0 : i32
    %c0_i32_0 = arith.constant 0 : i32
    return %arg0, %c0_i32 : i32, i32
  }
}

module attributes {stable_mosaic.version = 11 : i64} {
  func.func @adj_decoder_kernel(%arg0: i32, %arg1: memref<8x128xbf16, #tpu.memory_space<vmem>>, %arg2: memref<8x128xbf16, #tpu.memory_space<vmem>>, %arg3: memref<8x128xbf16, #tpu.memory_space<vmem>>, %arg4: memref<128x128xbf16, #tpu.memory_space<vmem>>, %arg5: memref<1x128xf32, #tpu.memory_space<vmem>>, %arg6: memref<128x128xbf16, #tpu.memory_space<vmem>>, %arg7: memref<1x128xf32, #tpu.memory_space<vmem>>, %arg8: memref<128x128xbf16, #tpu.memory_space<vmem>>, %arg9: memref<1x128xf32, #tpu.memory_space<vmem>>, %arg10: memref<128x128xbf16, #tpu.memory_space<vmem>>, %arg11: memref<1x128xf32, #tpu.memory_space<vmem>>, %arg12: memref<8x256xf32, #tpu.memory_space<vmem>>) attributes {dimension_semantics = [#tpu.dimension_semantics<parallel>], iteration_bounds = array<i64: 1>, scalar_prefetch = 0 : i64, scratch_operands = 0 : i64, tpu.core_type = #tpu.core_type<tc>, window_params = [{transform_indices = @transform_0, window_bounds = array<i64: 8, 128>}, {transform_indices = @transform_1, window_bounds = array<i64: 8, 128>}, {transform_indices = @transform_2, window_bounds = array<i64: 8, 128>}, {pipeline_mode = #tpu.pipeline_mode<synchronous>, transform_indices = @transform_3, window_bounds = array<i64: 128, 128>}, {pipeline_mode = #tpu.pipeline_mode<synchronous>, transform_indices = @transform_4, window_bounds = array<i64: 1, 128>}, {pipeline_mode = #tpu.pipeline_mode<synchronous>, transform_indices = @transform_5, window_bounds = array<i64: 128, 128>}, {pipeline_mode = #tpu.pipeline_mode<synchronous>, transform_indices = @transform_6, window_bounds = array<i64: 1, 128>}, {pipeline_mode = #tpu.pipeline_mode<synchronous>, transform_indices = @transform_7, window_bounds = array<i64: 128, 128>}, {pipeline_mode = #tpu.pipeline_mode<synchronous>, transform_indices = @transform_8, window_bounds = array<i64: 1, 128>}, {pipeline_mode = #tpu.pipeline_mode<synchronous>, transform_indices = @transform_9, window_bounds = array<i64: 128, 128>}, {pipeline_mode = #tpu.pipeline_mode<synchronous>, transform_indices = @transform_10, window_bounds = array<i64: 1, 128>}, {transform_indices = @transform_11, window_bounds = array<i64: 8, 256>}]} {
    %c0 = arith.constant 0 : index
    %c0_0 = arith.constant 0 : index
    %0 = vector.load %arg1[%c0, %c0_0] : memref<8x128xbf16, #tpu.memory_space<vmem>>, vector<8x128xbf16>
    %c0_1 = arith.constant 0 : index
    %c0_2 = arith.constant 0 : index
    %1 = vector.load %arg4[%c0_1, %c0_2] : memref<128x128xbf16, #tpu.memory_space<vmem>>, vector<128x128xbf16>
    %cst = arith.constant dense<0.000000e+00> : vector<8x128xf32>
    %2 = tpu.matmul %0, %1, %cst {dimension_numbers = #tpu.dot_dimension_numbers<[1], [0], [0], [1], [0, 0, 1, 1], [], []>} : vector<8x128xbf16>, vector<128x128xbf16>, vector<8x128xf32> -> vector<8x128xf32>
    %c0_3 = arith.constant 0 : index
    %c0_4 = arith.constant 0 : index
    %3 = vector.load %arg5[%c0_3, %c0_4] : memref<1x128xf32, #tpu.memory_space<vmem>>, vector<1x128xf32>
    %4 = vector.broadcast %3 : vector<1x128xf32> to vector<8x128xf32>
    %5 = arith.addf %2, %4 : vector<8x128xf32>
    %6 = math.tanh %5 : vector<8x128xf32>
    %c0_5 = arith.constant 0 : index
    %c0_6 = arith.constant 0 : index
    %7 = vector.load %arg2[%c0_5, %c0_6] : memref<8x128xbf16, #tpu.memory_space<vmem>>, vector<8x128xbf16>
    %c0_7 = arith.constant 0 : index
    %c0_8 = arith.constant 0 : index
    %8 = vector.load %arg6[%c0_7, %c0_8] : memref<128x128xbf16, #tpu.memory_space<vmem>>, vector<128x128xbf16>
    %cst_9 = arith.constant dense<0.000000e+00> : vector<8x128xf32>
    %9 = tpu.matmul %7, %8, %cst_9 {dimension_numbers = #tpu.dot_dimension_numbers<[1], [0], [0], [1], [0, 0, 1, 1], [], []>} : vector<8x128xbf16>, vector<128x128xbf16>, vector<8x128xf32> -> vector<8x128xf32>
    %c0_10 = arith.constant 0 : index
    %c0_11 = arith.constant 0 : index
    %10 = vector.load %arg7[%c0_10, %c0_11] : memref<1x128xf32, #tpu.memory_space<vmem>>, vector<1x128xf32>
    %11 = vector.broadcast %10 : vector<1x128xf32> to vector<8x128xf32>
    %12 = arith.addf %9, %11 : vector<8x128xf32>
    %13 = math.tanh %12 : vector<8x128xf32>
    %c0_12 = arith.constant 0 : index
    %c0_13 = arith.constant 0 : index
    %14 = vector.load %arg3[%c0_12, %c0_13] : memref<8x128xbf16, #tpu.memory_space<vmem>>, vector<8x128xbf16>
    %c0_14 = arith.constant 0 : index
    %c0_15 = arith.constant 0 : index
    %15 = vector.load %arg6[%c0_14, %c0_15] : memref<128x128xbf16, #tpu.memory_space<vmem>>, vector<128x128xbf16>
    %cst_16 = arith.constant dense<0.000000e+00> : vector<8x128xf32>
    %16 = tpu.matmul %14, %15, %cst_16 {dimension_numbers = #tpu.dot_dimension_numbers<[1], [0], [0], [1], [0, 0, 1, 1], [], []>} : vector<8x128xbf16>, vector<128x128xbf16>, vector<8x128xf32> -> vector<8x128xf32>
    %c0_17 = arith.constant 0 : index
    %c0_18 = arith.constant 0 : index
    %17 = vector.load %arg7[%c0_17, %c0_18] : memref<1x128xf32, #tpu.memory_space<vmem>>, vector<1x128xf32>
    %18 = vector.broadcast %17 : vector<1x128xf32> to vector<8x128xf32>
    %19 = arith.addf %16, %18 : vector<8x128xf32>
    %20 = math.tanh %19 : vector<8x128xf32>
    %21 = arith.addf %6, %13 : vector<8x128xf32>
    %22 = arith.truncf %21 : vector<8x128xf32> to vector<8x128xbf16>
    %c0_19 = arith.constant 0 : index
    %c0_20 = arith.constant 0 : index
    %23 = vector.load %arg8[%c0_19, %c0_20] : memref<128x128xbf16, #tpu.memory_space<vmem>>, vector<128x128xbf16>
    %cst_21 = arith.constant dense<0.000000e+00> : vector<8x128xf32>
    %24 = tpu.matmul %22, %23, %cst_21 {dimension_numbers = #tpu.dot_dimension_numbers<[1], [0], [0], [1], [0, 0, 1, 1], [], []>} : vector<8x128xbf16>, vector<128x128xbf16>, vector<8x128xf32> -> vector<8x128xf32>
    %c0_22 = arith.constant 0 : index
    %c0_23 = arith.constant 0 : index
    %25 = vector.load %arg9[%c0_22, %c0_23] : memref<1x128xf32, #tpu.memory_space<vmem>>, vector<1x128xf32>
    %26 = vector.broadcast %25 : vector<1x128xf32> to vector<8x128xf32>
    %27 = arith.addf %24, %26 : vector<8x128xf32>
    %28 = math.tanh %27 : vector<8x128xf32>
    %29 = arith.addf %6, %20 : vector<8x128xf32>
    %30 = arith.truncf %29 : vector<8x128xf32> to vector<8x128xbf16>
    %c0_24 = arith.constant 0 : index
    %c0_25 = arith.constant 0 : index
    %31 = vector.load %arg10[%c0_24, %c0_25] : memref<128x128xbf16, #tpu.memory_space<vmem>>, vector<128x128xbf16>
    %cst_26 = arith.constant dense<0.000000e+00> : vector<8x128xf32>
    %32 = tpu.matmul %30, %31, %cst_26 {dimension_numbers = #tpu.dot_dimension_numbers<[1], [0], [0], [1], [0, 0, 1, 1], [], []>} : vector<8x128xbf16>, vector<128x128xbf16>, vector<8x128xf32> -> vector<8x128xf32>
    %c0_27 = arith.constant 0 : index
    %c0_28 = arith.constant 0 : index
    %33 = vector.load %arg11[%c0_27, %c0_28] : memref<1x128xf32, #tpu.memory_space<vmem>>, vector<1x128xf32>
    %34 = vector.broadcast %33 : vector<1x128xf32> to vector<8x128xf32>
    %35 = arith.addf %32, %34 : vector<8x128xf32>
    %36 = math.tanh %35 : vector<8x128xf32>
    %c0_29 = arith.constant 0 : index
    %c0_30 = arith.constant 0 : index
    %37 = vector.load %arg12[%c0_29, %c0_30] : memref<8x256xf32, #tpu.memory_space<vmem>>, vector<8x128xf32>
    tpu.vector_store %arg12[%c0_29, %c0_30], %28 {strides = array<i32>} : memref<8x256xf32, #tpu.memory_space<vmem>>, vector<8x128xf32>,
    %c0_31 = arith.constant 0 : index
    %c128 = arith.constant 128 : index
    %38 = vector.load %arg12[%c0_31, %c128] : memref<8x256xf32, #tpu.memory_space<vmem>>, vector<8x128xf32>
    tpu.vector_store %arg12[%c0_31, %c128], %36 {strides = array<i32>} : memref<8x256xf32, #tpu.memory_space<vmem>>, vector<8x128xf32>,
    return
  }
  func.func @transform_0(%arg0: i32) -> (i32, i32) {
    %c0_i32 = arith.constant 0 : i32
    %c0_i32_0 = arith.constant 0 : i32
    return %arg0, %c0_i32 : i32, i32
  }
  func.func @transform_1(%arg0: i32) -> (i32, i32) {
    %c0_i32 = arith.constant 0 : i32
    %c0_i32_0 = arith.constant 0 : i32
    return %arg0, %c0_i32 : i32, i32
  }
  func.func @transform_2(%arg0: i32) -> (i32, i32) {
    %c0_i32 = arith.constant 0 : i32
    %c0_i32_0 = arith.constant 0 : i32
    return %arg0, %c0_i32 : i32, i32
  }
  func.func @transform_3(%arg0: i32) -> (i32, i32) {
    %c0_i32 = arith.constant 0 : i32
    %c0_i32_0 = arith.constant 0 : i32
    %c0_i32_1 = arith.constant 0 : i32
    return %c0_i32, %c0_i32_0 : i32, i32
  }
  func.func @transform_4(%arg0: i32) -> (i32, i32) {
    %c0_i32 = arith.constant 0 : i32
    %c0_i32_0 = arith.constant 0 : i32
    %c0_i32_1 = arith.constant 0 : i32
    return %c0_i32, %c0_i32_0 : i32, i32
  }
  func.func @transform_5(%arg0: i32) -> (i32, i32) {
    %c0_i32 = arith.constant 0 : i32
    %c0_i32_0 = arith.constant 0 : i32
    %c0_i32_1 = arith.constant 0 : i32
    return %c0_i32, %c0_i32_0 : i32, i32
  }
  func.func @transform_6(%arg0: i32) -> (i32, i32) {
    %c0_i32 = arith.constant 0 : i32
    %c0_i32_0 = arith.constant 0 : i32
    %c0_i32_1 = arith.constant 0 : i32
    return %c0_i32, %c0_i32_0 : i32, i32
  }
  func.func @transform_7(%arg0: i32) -> (i32, i32) {
    %c0_i32 = arith.constant 0 : i32
    %c0_i32_0 = arith.constant 0 : i32
    %c0_i32_1 = arith.constant 0 : i32
    return %c0_i32, %c0_i32_0 : i32, i32
  }
  func.func @transform_8(%arg0: i32) -> (i32, i32) {
    %c0_i32 = arith.constant 0 : i32
    %c0_i32_0 = arith.constant 0 : i32
    %c0_i32_1 = arith.constant 0 : i32
    return %c0_i32, %c0_i32_0 : i32, i32
  }
  func.func @transform_9(%arg0: i32) -> (i32, i32) {
    %c0_i32 = arith.constant 0 : i32
    %c0_i32_0 = arith.constant 0 : i32
    %c0_i32_1 = arith.constant 0 : i32
    return %c0_i32, %c0_i32_0 : i32, i32
  }
  func.func @transform_10(%arg0: i32) -> (i32, i32) {
    %c0_i32 = arith.constant 0 : i32
    %c0_i32_0 = arith.constant 0 : i32
    %c0_i32_1 = arith.constant 0 : i32
    return %c0_i32, %c0_i32_0 : i32, i32
  }
  func.func @transform_11(%arg0: i32) -> (i32, i32) {
    %c0_i32 = arith.constant 0 : i32
    %c0_i32_0 = arith.constant 0 : i32
    return %arg0, %c0_i32 : i32, i32
  }
}

</mosaic_0001>

<llo_original>
// kernel: tpu_custom_call.1
$region0: #{tpu_custom_call.1}
  #allocation0 [shape = 'u32[]', space=smem, size = 0x4, offset = 0x4, fixed_abs, tag = 'smem constant byte address 0x4 - core index']
  #allocation1 [shape = 'u32[144,128]{1,0:T(1,128)}', space=vmem, size = 0x12000, scoped, tag = 'internal scratch']
  %s0 = inlined_call_operand.hbm [shape: bf16[8,128], index: 0, kind: input, shape index: {}]
  %s1 = inlined_call_operand.hbm [shape: bf16[8,128], index: 1, kind: input, shape index: {}]
  %s2 = inlined_call_operand.hbm [shape: bf16[8,128], index: 2, kind: input, shape index: {}]
  %s3 = inlined_call_operand.hbm [shape: bf16[128,128], index: 3, kind: input, shape index: {}]
  %s4 = inlined_call_operand.vmem [shape: f32[1,128], index: 4, kind: input, shape index: {}]
  %s5 = inlined_call_operand.hbm [shape: bf16[128,128], index: 5, kind: input, shape index: {}]
  %s6 = inlined_call_operand.vmem [shape: f32[1,128], index: 6, kind: input, shape index: {}]
  %s7 = inlined_call_operand.hbm [shape: bf16[128,128], index: 7, kind: input, shape index: {}]
  %s8 = inlined_call_operand.vmem [shape: f32[1,128], index: 8, kind: input, shape index: {}]
  %s9 = inlined_call_operand.hbm [shape: bf16[128,128], index: 9, kind: input, shape index: {}]
  %s10 = inlined_call_operand.vmem [shape: f32[1,128], index: 10, kind: input, shape index: {}]
  %s11 = inlined_call_operand.hbm [shape: f32[8,256], index: 11, kind: output, shape index: {}]
  %s12 = sld [smem:[#allocation0]]
  $region82: #{tpu_custom_call.1} parent=0
    _
  %s14 = ssub.s32 1, %s12
  %s15 = scalar_select 0, %s14, %s12
  $region1: #{tpu_custom_call.1} parent=0
    #allocation2 [shape = 'u8[2048]{0}', space=vmem, size = 0x800, scoped, tag = 'input window, operand 0, single buffered']
    #allocation3 [shape = 's32[1]{0}', space=sflag, size = 0x4, scoped, tag = 'scoped memory for tpu_custom_call.1']
    #allocation4 [shape = 's32[1]{0}', space=sflag, size = 0x4, scoped, tag = 'scoped memory for tpu_custom_call.1']
    #allocation5 [shape = 'u8[2048]{0}', space=vmem, size = 0x800, scoped, tag = 'input window, operand 1, single buffered']
    #allocation6 [shape = 's32[1]{0}', space=sflag, size = 0x4, scoped, tag = 'scoped memory for tpu_custom_call.1']
    #allocation7 [shape = 'u8[2048]{0}', space=vmem, size = 0x800, scoped, tag = 'input window, operand 2, single buffered']
    #allocation8 [shape = 'u8[32768]{0}', space=vmem, size = 0x8000, scoped, tag = 'input window, operand 3, single buffered']
    #allocation9 [shape = 's32[1]{0}', space=sflag, size = 0x4, scoped, tag = 'scoped memory for tpu_custom_call.1']
    #allocation10 [shape = 'u8[32768]{0}', space=vmem, size = 0x8000, scoped, tag = 'input window, operand 5, single buffered']
    #allocation11 [shape = 'u8[32768]{0}', space=vmem, size = 0x8000, scoped, tag = 'input window, operand 7, single buffered']
    #allocation12 [shape = 's32[1]{0}', space=sflag, size = 0x4, scoped, tag = 'scoped memory for tpu_custom_call.1']
    #allocation13 [shape = 'u8[32768]{0}', space=vmem, size = 0x8000, scoped, tag = 'input window, operand 9, single buffered']
    #allocation14 [shape = 'u8[8192]{0}', space=vmem, size = 0x2000, scoped, tag = 'output window, operand 0, single buffered']
    %16 = vsyncpa [#allocation3], 0
    %17 = vsyncpa [#allocation6], 0
    %18 = vsyncpa [#allocation9], 0
    %19 = vsyncpa [#allocation12], 0
    %20 = vsyncpa [#allocation4], 0
    // Predicated region
    $region2: #{tpu_custom_call.1} parent=1 // pred_check
      _
    $region3: #{tpu_custom_call.1} parent=1 // pred_check_branch
      %22 = sbr.rel (0) target = $region5
    $region4: #{tpu_custom_call.1} parent=1 // pred_region
      %s24 = ssub.s32 64, 64
      %25 = vsyncadd [#allocation3], %s24
      %s27 = sshll.u32 [#allocation2], 4
      %s28 = int_to_ptr.vmem [resolvable:$true] %s27
      %30 = dma.hbm_to_vmem [thread:$0]  %s0, 64, %s28, [#allocation3]
    $region5: #{tpu_custom_call.1} parent=1 // pred_fallthru
      _
    // Predicated region
    $region6: #{tpu_custom_call.1} parent=1 // pred_check
      _
    $region7: #{tpu_custom_call.1} parent=1 // pred_check_branch
      %32 = sbr.rel (0) target = $region9
    $region8: #{tpu_custom_call.1} parent=1 // pred_region
      %s34 = ssub.s32 64, 64
      %35 = vsyncadd [#allocation6], %s34
      %s37 = sshll.u32 [#allocation5], 4
      %s38 = int_to_ptr.vmem [resolvable:$true] %s37
      %40 = dma.hbm_to_vmem [thread:$0]  %s1, 64, %s38, [#allocation6]
    $region9: #{tpu_custom_call.1} parent=1 // pred_fallthru
      _
    // Predicated region
    $region10: #{tpu_custom_call.1} parent=1 // pred_check
      _
    $region11: #{tpu_custom_call.1} parent=1 // pred_check_branch
      %42 = sbr.rel (0) target = $region13
    $region12: #{tpu_custom_call.1} parent=1 // pred_region
      %s44 = ssub.s32 64, 64
      %45 = vsyncadd [#allocation6], %s44
      %s47 = sshll.u32 [#allocation7], 4
      %s48 = int_to_ptr.vmem [resolvable:$true] %s47
      %50 = dma.hbm_to_vmem [thread:$0]  %s2, 64, %s48, [#allocation6]
    $region13: #{tpu_custom_call.1} parent=1 // pred_fallthru
      _
    // Predicated region
    $region14: #{tpu_custom_call.1} parent=1 // pred_check
      _
    $region15: #{tpu_custom_call.1} parent=1 // pred_check_branch
      %52 = sbr.rel (0) target = $region17
    $region16: #{tpu_custom_call.1} parent=1 // pred_region
      %s54 = ssub.s32 1024, 1024
      %55 = vsyncadd [#allocation9], %s54
      %s56 = sshll.u32 [#allocation8], 4
      %s57 = int_to_ptr.vmem [resolvable:$true] %s56
      %62 = dma.hbm_to_vmem [thread:$0]  %s3, 1024, %s57, [#allocation9], 64, 64, 4
    $region17: #{tpu_custom_call.1} parent=1 // pred_fallthru
      _
    // Predicated region
    $region18: #{tpu_custom_call.1} parent=1 // pred_check
      _
    $region19: #{tpu_custom_call.1} parent=1 // pred_check_branch
      %64 = sbr.rel (0) target = $region21
    $region20: #{tpu_custom_call.1} parent=1 // pred_region
      _
    $region21: #{tpu_custom_call.1} parent=1 // pred_fallthru
      _
    // Predicated region
    $region22: #{tpu_custom_call.1} parent=1 // pred_check
      _
    $region23: #{tpu_custom_call.1} parent=1 // pred_check_branch
      %66 = sbr.rel (0) target = $region25
    $region24: #{tpu_custom_call.1} parent=1 // pred_region
      %s68 = ssub.s32 1024, 1024
      %69 = vsyncadd [#allocation9], %s68
      %s70 = sshll.u32 [#allocation10], 4
      %s71 = int_to_ptr.vmem [resolvable:$true] %s70
      %76 = dma.hbm_to_vmem [thread:$0]  %s5, 1024, %s71, [#allocation9], 64, 64, 4
    $region25: #{tpu_custom_call.1} parent=1 // pred_fallthru
      _
    // Predicated region
    $region26: #{tpu_custom_call.1} parent=1 // pred_check
      _
    $region27: #{tpu_custom_call.1} parent=1 // pred_check_branch
      %78 = sbr.rel (0) target = $region29
    $region28: #{tpu_custom_call.1} parent=1 // pred_region
      _
    $region29: #{tpu_custom_call.1} parent=1 // pred_fallthru
      _
    // Predicated region
    $region30: #{tpu_custom_call.1} parent=1 // pred_check
      _
    $region31: #{tpu_custom_call.1} parent=1 // pred_check_branch
      %80 = sbr.rel (0) target = $region33
    $region32: #{tpu_custom_call.1} parent=1 // pred_region
      %s82 = ssub.s32 1024, 1024
      %83 = vsyncadd [#allocation12], %s82
      %s84 = sshll.u32 [#allocation11], 4
      %s85 = int_to_ptr.vmem [resolvable:$true] %s84
      %90 = dma.hbm_to_vmem [thread:$0]  %s7, 1024, %s85, [#allocation12], 64, 64, 4
    $region33: #{tpu_custom_call.1} parent=1 // pred_fallthru
      _
    // Predicated region
    $region34: #{tpu_custom_call.1} parent=1 // pred_check
      _
    $region35: #{tpu_custom_call.1} parent=1 // pred_check_branch
      %92 = sbr.rel (0) target = $region37
    $region36: #{tpu_custom_call.1} parent=1 // pred_region
      _
    $region37: #{tpu_custom_call.1} parent=1 // pred_fallthru
      _
    // Predicated region
    $region38: #{tpu_custom_call.1} parent=1 // pred_check
      _
    $region39: #{tpu_custom_call.1} parent=1 // pred_check_branch
      %94 = sbr.rel (0) target = $region41
    $region40: #{tpu_custom_call.1} parent=1 // pred_region
      %s96 = ssub.s32 1024, 1024
      %97 = vsyncadd [#allocation12], %s96
      %s98 = sshll.u32 [#allocation13], 4
      %s99 = int_to_ptr.vmem [resolvable:$true] %s98
      %104 = dma.hbm_to_vmem [thread:$0]  %s9, 1024, %s99, [#allocation12], 64, 64, 4
    $region41: #{tpu_custom_call.1} parent=1 // pred_fallthru
      _
    // Predicated region
    $region42: #{tpu_custom_call.1} parent=1 // pred_check
      _
    $region43: #{tpu_custom_call.1} parent=1 // pred_check_branch
      %106 = sbr.rel (0) target = $region45
    $region44: #{tpu_custom_call.1} parent=1 // pred_region
      _
    $region45: #{tpu_custom_call.1} parent=1 // pred_fallthru
      _
    // Predicated region
    $region46: #{tpu_custom_call.1} parent=1 // pred_check
      _
    $region47: #{tpu_custom_call.1} parent=1 // pred_check_branch
      %108 = sbr.rel (0) target = $region49
    $region48: #{tpu_custom_call.1} parent=1 // pred_region
      %109 = dma.done [#allocation3], 64
    $region49: #{tpu_custom_call.1} parent=1 // pred_fallthru
      _
    // Predicated region
    $region50: #{tpu_custom_call.1} parent=1 // pred_check
      _
    $region51: #{tpu_custom_call.1} parent=1 // pred_check_branch
      %111 = sbr.rel (0) target = $region53
    $region52: #{tpu_custom_call.1} parent=1 // pred_region
      %112 = dma.done [#allocation6], 64
    $region53: #{tpu_custom_call.1} parent=1 // pred_fallthru
      _
    // Predicated region
    $region54: #{tpu_custom_call.1} parent=1 // pred_check
      _
    $region55: #{tpu_custom_call.1} parent=1 // pred_check_branch
      %114 = sbr.rel (0) target = $region57
    $region56: #{tpu_custom_call.1} parent=1 // pred_region
      %115 = dma.done [#allocation6], 64
    $region57: #{tpu_custom_call.1} parent=1 // pred_fallthru
      _
    // Predicated region
    $region58: #{tpu_custom_call.1} parent=1 // pred_check
      _
    $region59: #{tpu_custom_call.1} parent=1 // pred_check_branch
      %117 = sbr.rel (0) target = $region61
    $region60: #{tpu_custom_call.1} parent=1 // pred_region
      %118 = dma.done [#allocation9], 1024
    $region61: #{tpu_custom_call.1} parent=1 // pred_fallthru
      _
    // Predicated region
    $region62: #{tpu_custom_call.1} parent=1 // pred_check
      _
    $region63: #{tpu_custom_call.1} parent=1 // pred_check_branch
      %120 = sbr.rel (0) target = $region65
    $region64: #{tpu_custom_call.1} parent=1 // pred_region
      %121 = dma.done [#allocation9], 1024
    $region65: #{tpu_custom_call.1} parent=1 // pred_fallthru
      _
    // Predicated region
    $region66: #{tpu_custom_call.1} parent=1 // pred_check
      _
    $region67: #{tpu_custom_call.1} parent=1 // pred_check_branch
      %123 = sbr.rel (0) target = $region69
    $region68: #{tpu_custom_call.1} parent=1 // pred_region
      %124 = dma.done [#allocation12], 1024
    $region69: #{tpu_custom_call.1} parent=1 // pred_fallthru
      _
    // Predicated region
    $region70: #{tpu_custom_call.1} parent=1 // pred_check
      _
    $region71: #{tpu_custom_call.1} parent=1 // pred_check_branch
      %126 = sbr.rel (0) target = $region73
    $region72: #{tpu_custom_call.1} parent=1 // pred_region
      %127 = dma.done [#allocation12], 1024
    $region73: #{tpu_custom_call.1} parent=1 // pred_fallthru
      _
    %v129 = vld [vmem:[#allocation2] sm:$0xf]
    %v130 = vld [vmem:[#allocation8] sm:$0xf]
    %v131 = vld [vmem:[#allocation8 + $0x4] sm:$0xf]
    %v132 = vld [vmem:[#allocation8 + $0x8] sm:$0xf]
    %v133 = vld [vmem:[#allocation8 + $0xc] sm:$0xf]
    %v134 = vld [vmem:[#allocation8 + $0x10] sm:$0xf]
    %v135 = vld [vmem:[#allocation8 + $0x14] sm:$0xf]
    %v136 = vld [vmem:[#allocation8 + $0x18] sm:$0xf]
    %v137 = vld [vmem:[#allocation8 + $0x1c] sm:$0xf]
    %v138 = vld [vmem:[#allocation8 + $0x20] sm:$0xf]
    %v139 = vld [vmem:[#allocation8 + $0x24] sm:$0xf]
    %v140 = vld [vmem:[#allocation8 + $0x28] sm:$0xf]
    %v141 = vld [vmem:[#allocation8 + $0x2c] sm:$0xf]
    %v142 = vld [vmem:[#allocation8 + $0x30] sm:$0xf]
    %v143 = vld [vmem:[#allocation8 + $0x34] sm:$0xf]
    %v144 = vld [vmem:[#allocation8 + $0x38] sm:$0xf]
    %v145 = vld [vmem:[#allocation8 + $0x3c] sm:$0xf]
    %v146 = vld [vmem:[%s4] sm:$0x1]
    %v148 = vlaneseq
    %v149 = vshrl.u32 %v148, 7
    %v150 = vsub.s32 0, %v149
    %v151 = vrot.slane %v146, %v150
    %v169 = vunpack.c.l.b16 %v130
    %v170 = vunpack.c.l.b16 %v131
    %v171 = vunpack.c.l.b16 %v132
    %v172 = vunpack.c.l.b16 %v133
    %v173 = vunpack.c.l.b16 %v134
    %v174 = vunpack.c.l.b16 %v135
    %v175 = vunpack.c.l.b16 %v136
    %v176 = vunpack.c.l.b16 %v137
    %v177 = vunpack.c.l.b16 %v138
    %v178 = vunpack.c.l.b16 %v139
    %v179 = vunpack.c.l.b16 %v140
    %v180 = vunpack.c.l.b16 %v141
    %v181 = vunpack.c.l.b16 %v142
    %v182 = vunpack.c.l.b16 %v143
    %v183 = vunpack.c.l.b16 %v144
    %v184 = vunpack.c.l.b16 %v145
    %v185 = vpack.c.b16 %v170, %v169
    %v186 = vpack.c.b16 %v172, %v171
    %v187 = vpack.c.b16 %v174, %v173
    %v188 = vpack.c.b16 %v176, %v175
    %v189 = vpack.c.b16 %v178, %v177
    %v190 = vpack.c.b16 %v180, %v179
    %v191 = vpack.c.b16 %v182, %v181
    %v192 = vpack.c.b16 %v184, %v183
    %201 = vmatprep.subr.bf16.mxu0 0
    %202 = vmatpush1.bf16.msra.mxu0 %v192
    %203 = vmatprep.subr.bf16.mxu0 0
    %204 = vmatpush1.bf16.msra.mxu0 %v191
    %205 = vmatprep.subr.bf16.mxu0 0
    %206 = vmatpush1.bf16.msra.mxu0 %v190
    %207 = vmatprep.subr.bf16.mxu0 0
    %208 = vmatpush1.bf16.msra.mxu0 %v189
    %209 = vmatprep.subr.bf16.mxu0 0
    %210 = vmatpush1.bf16.msra.mxu0 %v188
    %211 = vmatprep.subr.bf16.mxu0 0
    %212 = vmatpush1.bf16.msra.mxu0 %v187
    %213 = vmatprep.subr.bf16.mxu0 0
    %214 = vmatpush1.bf16.msra.mxu0 %v186
    %215 = vmatprep.subr.bf16.mxu0 0
    %216 = vmatpush1.bf16.msra.mxu0 %v185
    %217 = vmatprep.subr.bf16.mxu0 0
    %218 = vmatpush2.bf16.msra.mxu0 0
    %219 = vmatprep.subr.bf16.mxu0 0
    %220 = vmatpush2.bf16.msra.mxu0 0
    %221 = vmatprep.subr.bf16.mxu0 0
    %222 = vmatpush2.bf16.msra.mxu0 0
    %223 = vmatprep.subr.bf16.mxu0 0
    %224 = vmatpush2.bf16.msra.mxu0 0
    %225 = vmatprep.subr.bf16.mxu0 0
    %226 = vmatpush2.bf16.msra.mxu0 0
    %227 = vmatprep.subr.bf16.mxu0 0
    %228 = vmatpush2.bf16.msra.mxu0 0
    %229 = vmatprep.subr.bf16.mxu0 0
    %230 = vmatpush2.bf16.msra.mxu0 0
    %231 = vmatprep.subr.bf16.mxu0 0
    %232 = vmatpush2.bf16.msra.mxu0 0
    %233 = vmatprep.mubr.bf16.mxu0 0
    %234 = vmatmul.mubr.bf16.gmra.mxu0 %v129
    %v235 = vpop.f32.mrf.mxu0
    %v236 = vadd.f32 %v151, %v235
    %v237 = vpop.f32.mrf.mxu0
    %v238 = vpop.f32.mrf.mxu0
    %v239 = vpop.f32.mrf.mxu0
    %240 = vdwg.mxu0
    %v241 = vtanh.pop %v236
    %v242 = vld [vmem:[#allocation5] sm:$0xf]
    %v243 = vld [vmem:[#allocation10] sm:$0xf]
    %v244 = vld [vmem:[#allocation10 + $0x4] sm:$0xf]
    %v245 = vld [vmem:[#allocation10 + $0x8] sm:$0xf]
    %v246 = vld [vmem:[#allocation10 + $0xc] sm:$0xf]
    %v247 = vld [vmem:[#allocation10 + $0x10] sm:$0xf]
    %v248 = vld [vmem:[#allocation10 + $0x14] sm:$0xf]
    %v249 = vld [vmem:[#allocation10 + $0x18] sm:$0xf]
    %v250 = vld [vmem:[#allocation10 + $0x1c] sm:$0xf]
    %v251 = vld [vmem:[#allocation10 + $0x20] sm:$0xf]
    %v252 = vld [vmem:[#allocation10 + $0x24] sm:$0xf]
    %v253 = vld [vmem:[#allocation10 + $0x28] sm:$0xf]
    %v254 = vld [vmem:[#allocation10 + $0x2c] sm:$0xf]
    %v255 = vld [vmem:[#allocation10 + $0x30] sm:$0xf]
    %v256 = vld [vmem:[#allocation10 + $0x34] sm:$0xf]
    %v257 = vld [vmem:[#allocation10 + $0x38] sm:$0xf]
    %v258 = vld [vmem:[#allocation10 + $0x3c] sm:$0xf]
    %v259 = vld [vmem:[%s6] sm:$0x1]
    %v261 = vlaneseq
    %v262 = vshrl.u32 %v261, 7
    %v263 = vsub.s32 0, %v262
    %v264 = vrot.slane %v259, %v263
    %v282 = vunpack.c.l.b16 %v243
    %v283 = vunpack.c.l.b16 %v244
    %v284 = vunpack.c.l.b16 %v245
    %v285 = vunpack.c.l.b16 %v246
    %v286 = vunpack.c.l.b16 %v247
    %v287 = vunpack.c.l.b16 %v248
    %v288 = vunpack.c.l.b16 %v249
    %v289 = vunpack.c.l.b16 %v250
    %v290 = vunpack.c.l.b16 %v251
    %v291 = vunpack.c.l.b16 %v252
    %v292 = vunpack.c.l.b16 %v253
    %v293 = vunpack.c.l.b16 %v254
    %v294 = vunpack.c.l.b16 %v255
    %v295 = vunpack.c.l.b16 %v256
    %v296 = vunpack.c.l.b16 %v257
    %v297 = vunpack.c.l.b16 %v258
    %v298 = vpack.c.b16 %v283, %v282
    %v299 = vpack.c.b16 %v285, %v284
    %v300 = vpack.c.b16 %v287, %v286
    %v301 = vpack.c.b16 %v289, %v288
    %v302 = vpack.c.b16 %v291, %v290
    %v303 = vpack.c.b16 %v293, %v292
    %v304 = vpack.c.b16 %v295, %v294
    %v305 = vpack.c.b16 %v297, %v296
    %314 = vmatprep.subr.bf16.mxu0 0
    %315 = vmatpush1.bf16.msra.mxu0 %v305
    %316 = vmatprep.subr.bf16.mxu0 0
    %317 = vmatpush1.bf16.msra.mxu0 %v304
    %318 = vmatprep.subr.bf16.mxu0 0
    %319 = vmatpush1.bf16.msra.mxu0 %v303
    %320 = vmatprep.subr.bf16.mxu0 0
    %321 = vmatpush1.bf16.msra.mxu0 %v302
    %322 = vmatprep.subr.bf16.mxu0 0
    %323 = vmatpush1.bf16.msra.mxu0 %v301
    %324 = vmatprep.subr.bf16.mxu0 0
    %325 = vmatpush1.bf16.msra.mxu0 %v300
    %326 = vmatprep.subr.bf16.mxu0 0
    %327 = vmatpush1.bf16.msra.mxu0 %v299
    %328 = vmatprep.subr.bf16.mxu0 0
    %329 = vmatpush1.bf16.msra.mxu0 %v298
    %330 = vmatprep.subr.bf16.mxu0 0
    %331 = vmatpush2.bf16.msra.mxu0 0
    %332 = vmatprep.subr.bf16.mxu0 0
    %333 = vmatpush2.bf16.msra.mxu0 0
    %334 = vmatprep.subr.bf16.mxu0 0
    %335 = vmatpush2.bf16.msra.mxu0 0
    %336 = vmatprep.subr.bf16.mxu0 0
    %337 = vmatpush2.bf16.msra.mxu0 0
    %338 = vmatprep.subr.bf16.mxu0 0
    %339 = vmatpush2.bf16.msra.mxu0 0
    %340 = vmatprep.subr.bf16.mxu0 0
    %341 = vmatpush2.bf16.msra.mxu0 0
    %342 = vmatprep.subr.bf16.mxu0 0
    %343 = vmatpush2.bf16.msra.mxu0 0
    %344 = vmatprep.subr.bf16.mxu0 0
    %345 = vmatpush2.bf16.msra.mxu0 0
    %346 = vmatprep.mubr.bf16.mxu0 0
    %347 = vmatmul.mubr.bf16.gmra.mxu0 %v242
    %v348 = vpop.f32.mrf.mxu0
    %v349 = vadd.f32 %v264, %v348
    %v350 = vpop.f32.mrf.mxu0
    %v351 = vpop.f32.mrf.mxu0
    %v352 = vpop.f32.mrf.mxu0
    %353 = vdwg.mxu0
    %v354 = vtanh.pop %v349
    %v355 = vld [vmem:[#allocation7] sm:$0xf]
    %356 = vmatprep.subr.bf16.mxu0 0
    %357 = vmatpush1.bf16.msra.mxu0 %v305
    %358 = vmatprep.subr.bf16.mxu0 0
    %359 = vmatpush1.bf16.msra.mxu0 %v304
    %360 = vmatprep.subr.bf16.mxu0 0
    %361 = vmatpush1.bf16.msra.mxu0 %v303
    %362 = vmatprep.subr.bf16.mxu0 0
    %363 = vmatpush1.bf16.msra.mxu0 %v302
    %364 = vmatprep.subr.bf16.mxu0 0
    %365 = vmatpush1.bf16.msra.mxu0 %v301
    %366 = vmatprep.subr.bf16.mxu0 0
    %367 = vmatpush1.bf16.msra.mxu0 %v300
    %368 = vmatprep.subr.bf16.mxu0 0
    %369 = vmatpush1.bf16.msra.mxu0 %v299
    %370 = vmatprep.subr.bf16.mxu0 0
    %371 = vmatpush1.bf16.msra.mxu0 %v298
    %372 = vmatprep.subr.bf16.mxu0 0
    %373 = vmatpush2.bf16.msra.mxu0 0
    %374 = vmatprep.subr.bf16.mxu0 0
    %375 = vmatpush2.bf16.msra.mxu0 0
    %376 = vmatprep.subr.bf16.mxu0 0
    %377 = vmatpush2.bf16.msra.mxu0 0
    %378 = vmatprep.subr.bf16.mxu0 0
    %379 = vmatpush2.bf16.msra.mxu0 0
    %380 = vmatprep.subr.bf16.mxu0 0
    %381 = vmatpush2.bf16.msra.mxu0 0
    %382 = vmatprep.subr.bf16.mxu0 0
    %383 = vmatpush2.bf16.msra.mxu0 0
    %384 = vmatprep.subr.bf16.mxu0 0
    %385 = vmatpush2.bf16.msra.mxu0 0
    %386 = vmatprep.subr.bf16.mxu0 0
    %387 = vmatpush2.bf16.msra.mxu0 0
    %388 = vmatprep.mubr.bf16.mxu0 0
    %389 = vmatmul.mubr.bf16.gmra.mxu0 %v355
    %v390 = vpop.f32.mrf.mxu0
    %v391 = vadd.f32 %v264, %v390
    %v392 = vpop.f32.mrf.mxu0
    %v393 = vpop.f32.mrf.mxu0
    %v394 = vpop.f32.mrf.mxu0
    %395 = vdwg.mxu0
    %v396 = vtanh.pop %v391
    %v397 = vadd.f32 %v241, %v354
    %v398 = vpack.c.bf16 %v397, %v397
    %v399 = vld [vmem:[#allocation11] sm:$0xf]
    %v400 = vld [vmem:[#allocation11 + $0x4] sm:$0xf]
    %v401 = vld [vmem:[#allocation11 + $0x8] sm:$0xf]
    %v402 = vld [vmem:[#allocation11 + $0xc] sm:$0xf]
    %v403 = vld [vmem:[#allocation11 + $0x10] sm:$0xf]
    %v404 = vld [vmem:[#allocation11 + $0x14] sm:$0xf]
    %v405 = vld [vmem:[#allocation11 + $0x18] sm:$0xf]
    %v406 = vld [vmem:[#allocation11 + $0x1c] sm:$0xf]
    %v407 = vld [vmem:[#allocation11 + $0x20] sm:$0xf]
    %v408 = vld [vmem:[#allocation11 + $0x24] sm:$0xf]
    %v409 = vld [vmem:[#allocation11 + $0x28] sm:$0xf]
    %v410 = vld [vmem:[#allocation11 + $0x2c] sm:$0xf]
    %v411 = vld [vmem:[#allocation11 + $0x30] sm:$0xf]
    %v412 = vld [vmem:[#allocation11 + $0x34] sm:$0xf]
    %v413 = vld [vmem:[#allocation11 + $0x38] sm:$0xf]
    %v414 = vld [vmem:[#allocation11 + $0x3c] sm:$0xf]
    %v415 = vld [vmem:[%s8] sm:$0x1]
    %v417 = vlaneseq
    %v418 = vshrl.u32 %v417, 7
    %v419 = vsub.s32 0, %v418
    %v420 = vrot.slane %v415, %v419
    %v438 = vunpack.c.l.b16 %v399
    %v439 = vunpack.c.l.b16 %v400
    %v440 = vunpack.c.l.b16 %v401
    %v441 = vunpack.c.l.b16 %v402
    %v442 = vunpack.c.l.b16 %v403
    %v443 = vunpack.c.l.b16 %v404
    %v444 = vunpack.c.l.b16 %v405
    %v445 = vunpack.c.l.b16 %v406
    %v446 = vunpack.c.l.b16 %v407
    %v447 = vunpack.c.l.b16 %v408
    %v448 = vunpack.c.l.b16 %v409
    %v449 = vunpack.c.l.b16 %v410
    %v450 = vunpack.c.l.b16 %v411
    %v451 = vunpack.c.l.b16 %v412
    %v452 = vunpack.c.l.b16 %v413
    %v453 = vunpack.c.l.b16 %v414
    %v454 = vpack.c.b16 %v439, %v438
    %v455 = vpack.c.b16 %v441, %v440
    %v456 = vpack.c.b16 %v443, %v442
    %v457 = vpack.c.b16 %v445, %v444
    %v458 = vpack.c.b16 %v447, %v446
    %v459 = vpack.c.b16 %v449, %v448
    %v460 = vpack.c.b16 %v451, %v450
    %v461 = vpack.c.b16 %v453, %v452
    %470 = vmatprep.subr.bf16.mxu0 0
    %471 = vmatpush1.bf16.msra.mxu0 %v461
    %472 = vmatprep.subr.bf16.mxu0 0
    %473 = vmatpush1.bf16.msra.mxu0 %v460
    %474 = vmatprep.subr.bf16.mxu0 0
    %475 = vmatpush1.bf16.msra.mxu0 %v459
    %476 = vmatprep.subr.bf16.mxu0 0
    %477 = vmatpush1.bf16.msra.mxu0 %v458
    %478 = vmatprep.subr.bf16.mxu0 0
    %479 = vmatpush1.bf16.msra.mxu0 %v457
    %480 = vmatprep.subr.bf16.mxu0 0
    %481 = vmatpush1.bf16.msra.mxu0 %v456
    %482 = vmatprep.subr.bf16.mxu0 0
    %483 = vmatpush1.bf16.msra.mxu0 %v455
    %484 = vmatprep.subr.bf16.mxu0 0
    %485 = vmatpush1.bf16.msra.mxu0 %v454
    %486 = vmatprep.subr.bf16.mxu0 0
    %487 = vmatpush2.bf16.msra.mxu0 0
    %488 = vmatprep.subr.bf16.mxu0 0
    %489 = vmatpush2.bf16.msra.mxu0 0
    %490 = vmatprep.subr.bf16.mxu0 0
    %491 = vmatpush2.bf16.msra.mxu0 0
    %492 = vmatprep.subr.bf16.mxu0 0
    %493 = vmatpush2.bf16.msra.mxu0 0
    %494 = vmatprep.subr.bf16.mxu0 0
    %495 = vmatpush2.bf16.msra.mxu0 0
    %496 = vmatprep.subr.bf16.mxu0 0
    %497 = vmatpush2.bf16.msra.mxu0 0
    %498 = vmatprep.subr.bf16.mxu0 0
    %499 = vmatpush2.bf16.msra.mxu0 0
    %500 = vmatprep.subr.bf16.mxu0 0
    %501 = vmatpush2.bf16.msra.mxu0 0
    %502 = vmatprep.mubr.bf16.mxu0 0
    %503 = vmatmul.mubr.bf16.gmra.mxu0 %v398
    %v504 = vpop.f32.mrf.mxu0
    %v505 = vadd.f32 %v420, %v504
    %v506 = vpop.f32.mrf.mxu0
    %v507 = vpop.f32.mrf.mxu0
    %v508 = vpop.f32.mrf.mxu0
    %509 = vdwg.mxu0
    %v510 = vtanh.pop %v505
    %v511 = vadd.f32 %v241, %v396
    %v512 = vpack.c.bf16 %v511, %v511
    %v513 = vld [vmem:[#allocation13] sm:$0xf]
    %v514 = vld [vmem:[#allocation13 + $0x4] sm:$0xf]
    %v515 = vld [vmem:[#allocation13 + $0x8] sm:$0xf]
    %v516 = vld [vmem:[#allocation13 + $0xc] sm:$0xf]
    %v517 = vld [vmem:[#allocation13 + $0x10] sm:$0xf]
    %v518 = vld [vmem:[#allocation13 + $0x14] sm:$0xf]
    %v519 = vld [vmem:[#allocation13 + $0x18] sm:$0xf]
    %v520 = vld [vmem:[#allocation13 + $0x1c] sm:$0xf]
    %v521 = vld [vmem:[#allocation13 + $0x20] sm:$0xf]
    %v522 = vld [vmem:[#allocation13 + $0x24] sm:$0xf]
    %v523 = vld [vmem:[#allocation13 + $0x28] sm:$0xf]
    %v524 = vld [vmem:[#allocation13 + $0x2c] sm:$0xf]
    %v525 = vld [vmem:[#allocation13 + $0x30] sm:$0xf]
    %v526 = vld [vmem:[#allocation13 + $0x34] sm:$0xf]
    %v527 = vld [vmem:[#allocation13 + $0x38] sm:$0xf]
    %v528 = vld [vmem:[#allocation13 + $0x3c] sm:$0xf]
    %v529 = vld [vmem:[%s10] sm:$0x1]
    %v531 = vlaneseq
    %v532 = vshrl.u32 %v531, 7
    %v533 = vsub.s32 0, %v532
    %v534 = vrot.slane %v529, %v533
    %v552 = vunpack.c.l.b16 %v513
    %v553 = vunpack.c.l.b16 %v514
    %v554 = vunpack.c.l.b16 %v515
    %v555 = vunpack.c.l.b16 %v516
    %v556 = vunpack.c.l.b16 %v517
    %v557 = vunpack.c.l.b16 %v518
    %v558 = vunpack.c.l.b16 %v519
    %v559 = vunpack.c.l.b16 %v520
    %v560 = vunpack.c.l.b16 %v521
    %v561 = vunpack.c.l.b16 %v522
    %v562 = vunpack.c.l.b16 %v523
    %v563 = vunpack.c.l.b16 %v524
    %v564 = vunpack.c.l.b16 %v525
    %v565 = vunpack.c.l.b16 %v526
    %v566 = vunpack.c.l.b16 %v527
    %v567 = vunpack.c.l.b16 %v528
    %v568 = vpack.c.b16 %v553, %v552
    %v569 = vpack.c.b16 %v555, %v554
    %v570 = vpack.c.b16 %v557, %v556
    %v571 = vpack.c.b16 %v559, %v558
    %v572 = vpack.c.b16 %v561, %v560
    %v573 = vpack.c.b16 %v563, %v562
    %v574 = vpack.c.b16 %v565, %v564
    %v575 = vpack.c.b16 %v567, %v566
    %584 = vmatprep.subr.bf16.mxu0 0
    %585 = vmatpush1.bf16.msra.mxu0 %v575
    %586 = vmatprep.subr.bf16.mxu0 0
    %587 = vmatpush1.bf16.msra.mxu0 %v574
    %588 = vmatprep.subr.bf16.mxu0 0
    %589 = vmatpush1.bf16.msra.mxu0 %v573
    %590 = vmatprep.subr.bf16.mxu0 0
    %591 = vmatpush1.bf16.msra.mxu0 %v572
    %592 = vmatprep.subr.bf16.mxu0 0
    %593 = vmatpush1.bf16.msra.mxu0 %v571
    %594 = vmatprep.subr.bf16.mxu0 0
    %595 = vmatpush1.bf16.msra.mxu0 %v570
    %596 = vmatprep.subr.bf16.mxu0 0
    %597 = vmatpush1.bf16.msra.mxu0 %v569
    %598 = vmatprep.subr.bf16.mxu0 0
    %599 = vmatpush1.bf16.msra.mxu0 %v568
    %600 = vmatprep.subr.bf16.mxu0 0
    %601 = vmatpush2.bf16.msra.mxu0 0
    %602 = vmatprep.subr.bf16.mxu0 0
    %603 = vmatpush2.bf16.msra.mxu0 0
    %604 = vmatprep.subr.bf16.mxu0 0
    %605 = vmatpush2.bf16.msra.mxu0 0
    %606 = vmatprep.subr.bf16.mxu0 0
    %607 = vmatpush2.bf16.msra.mxu0 0
    %608 = vmatprep.subr.bf16.mxu0 0
    %609 = vmatpush2.bf16.msra.mxu0 0
    %610 = vmatprep.subr.bf16.mxu0 0
    %611 = vmatpush2.bf16.msra.mxu0 0
    %612 = vmatprep.subr.bf16.mxu0 0
    %613 = vmatpush2.bf16.msra.mxu0 0
    %614 = vmatprep.subr.bf16.mxu0 0
    %615 = vmatpush2.bf16.msra.mxu0 0
    %616 = vmatprep.mubr.bf16.mxu0 0
    %617 = vmatmul.mubr.bf16.gmra.mxu0 %v512
    %v618 = vpop.f32.mrf.mxu0
    %v619 = vadd.f32 %v534, %v618
    %v620 = vpop.f32.mrf.mxu0
    %v621 = vpop.f32.mrf.mxu0
    %v622 = vpop.f32.mrf.mxu0
    %623 = vdwg.mxu0
    %v624 = vtanh.pop %v619
    %625 = vst [vmem:[#allocation14] sm:$0xff] %v510
    %626 = vst [vmem:[#allocation14 + $0x8] sm:$0xff] %v624
    // Predicated region
    $region74: #{tpu_custom_call.1} parent=1 // pred_check
      _
    $region75: #{tpu_custom_call.1} parent=1 // pred_check_branch
      %628 = sbr.rel (0) target = $region77
    $region76: #{tpu_custom_call.1} parent=1 // pred_region
      %s630 = ssub.s32 256, 256
      %631 = vsyncadd [#allocation4], %s630
      %s633 = sshll.u32 [#allocation14], 4
      %s634 = int_to_ptr.vmem [resolvable:$true] %s633
      %636 = dma.vmem_to_hbm [thread:$0]  %s634, 256, %s11, [#allocation4]
    $region77: #{tpu_custom_call.1} parent=1 // pred_fallthru
      _
    // Predicated region
    $region78: #{tpu_custom_call.1} parent=1 // pred_check
      _
    $region79: #{tpu_custom_call.1} parent=1 // pred_check_branch
      %638 = sbr.rel (0) target = $region81
    $region80: #{tpu_custom_call.1} parent=1 // pred_region
      %639 = dma.done [#allocation4], 256
    $region81: #{tpu_custom_call.1} parent=1 // pred_fallthru
      _
    %640 = vsyncpa [#allocation3], 1
    %641 = vsyncpa [#allocation6], 1
    %642 = vsyncpa [#allocation9], 1
    %643 = vsyncpa [#allocation12], 1
    %644 = vsyncpa [#allocation4], 1

// kernel: tpu_custom_call.1
$region0: #{tpu_custom_call.1}
  #allocation0 [shape = 'u32[]', space=smem, size = 0x4, offset = 0x4, fixed_abs, tag = 'smem constant byte address 0x4 - core index']
  #allocation1 [shape = 'u32[144,128]{1,0:T(1,128)}', space=vmem, size = 0x12000, scoped, tag = 'internal scratch']
  %s0 = inlined_call_operand.hbm [shape: bf16[8,128], index: 0, kind: input, shape index: {}]
  %s1 = inlined_call_operand.hbm [shape: bf16[8,128], index: 1, kind: input, shape index: {}]
  %s2 = inlined_call_operand.hbm [shape: bf16[8,128], index: 2, kind: input, shape index: {}]
  %s3 = inlined_call_operand.hbm [shape: bf16[128,128], index: 3, kind: input, shape index: {}]
  %s4 = inlined_call_operand.vmem [shape: f32[1,128], index: 4, kind: input, shape index: {}]
  %s5 = inlined_call_operand.hbm [shape: bf16[128,128], index: 5, kind: input, shape index: {}]
  %s6 = inlined_call_operand.vmem [shape: f32[1,128], index: 6, kind: input, shape index: {}]
  %s7 = inlined_call_operand.hbm [shape: bf16[128,128], index: 7, kind: input, shape index: {}]
  %s8 = inlined_call_operand.vmem [shape: f32[1,128], index: 8, kind: input, shape index: {}]
  %s9 = inlined_call_operand.hbm [shape: bf16[128,128], index: 9, kind: input, shape index: {}]
  %s10 = inlined_call_operand.vmem [shape: f32[1,128], index: 10, kind: input, shape index: {}]
  %s11 = inlined_call_operand.hbm [shape: f32[8,256], index: 11, kind: output, shape index: {}]
  %s12 = sld [smem:[#allocation0]]
  $region82: #{tpu_custom_call.1} parent=0
    _
  %s14 = ssub.s32 1, %s12
  %s15 = scalar_select 0, %s14, %s12
  $region1: #{tpu_custom_call.1} parent=0
    #allocation2 [shape = 'u8[2048]{0}', space=vmem, size = 0x800, scoped, tag = 'input window, operand 0, single buffered']
    #allocation3 [shape = 's32[1]{0}', space=sflag, size = 0x4, scoped, tag = 'scoped memory for tpu_custom_call.1']
    #allocation4 [shape = 's32[1]{0}', space=sflag, size = 0x4, scoped, tag = 'scoped memory for tpu_custom_call.1']
    #allocation5 [shape = 'u8[2048]{0}', space=vmem, size = 0x800, scoped, tag = 'input window, operand 1, single buffered']
    #allocation6 [shape = 's32[1]{0}', space=sflag, size = 0x4, scoped, tag = 'scoped memory for tpu_custom_call.1']
    #allocation7 [shape = 'u8[2048]{0}', space=vmem, size = 0x800, scoped, tag = 'input window, operand 2, single buffered']
    #allocation8 [shape = 'u8[32768]{0}', space=vmem, size = 0x8000, scoped, tag = 'input window, operand 3, single buffered']
    #allocation9 [shape = 's32[1]{0}', space=sflag, size = 0x4, scoped, tag = 'scoped memory for tpu_custom_call.1']
    #allocation10 [shape = 'u8[32768]{0}', space=vmem, size = 0x8000, scoped, tag = 'input window, operand 5, single buffered']
    #allocation11 [shape = 'u8[32768]{0}', space=vmem, size = 0x8000, scoped, tag = 'input window, operand 7, single buffered']
    #allocation12 [shape = 's32[1]{0}', space=sflag, size = 0x4, scoped, tag = 'scoped memory for tpu_custom_call.1']
    #allocation13 [shape = 'u8[32768]{0}', space=vmem, size = 0x8000, scoped, tag = 'input window, operand 9, single buffered']
    #allocation14 [shape = 'u8[8192]{0}', space=vmem, size = 0x2000, scoped, tag = 'output window, operand 0, single buffered']
    %16 = vsyncpa [#allocation3], 0
    %17 = vsyncpa [#allocation6], 0
    %18 = vsyncpa [#allocation9], 0
    %19 = vsyncpa [#allocation12], 0
    %20 = vsyncpa [#allocation4], 0
    // Predicated region
    $region2: #{tpu_custom_call.1} parent=1 // pred_check
      _
    $region3: #{tpu_custom_call.1} parent=1 // pred_check_branch
      %22 = sbr.rel (0) target = $region5
    $region4: #{tpu_custom_call.1} parent=1 // pred_region
      %s24 = ssub.s32 64, 64
      %25 = vsyncadd [#allocation3], %s24
      %s27 = sshll.u32 [#allocation2], 4
      %s28 = int_to_ptr.vmem [resolvable:$true] %s27
      %30 = dma.hbm_to_vmem [thread:$0]  %s0, 64, %s28, [#allocation3]
    $region5: #{tpu_custom_call.1} parent=1 // pred_fallthru
      _
    // Predicated region
    $region6: #{tpu_custom_call.1} parent=1 // pred_check
      _
    $region7: #{tpu_custom_call.1} parent=1 // pred_check_branch
      %32 = sbr.rel (0) target = $region9
    $region8: #{tpu_custom_call.1} parent=1 // pred_region
      %s34 = ssub.s32 64, 64
      %35 = vsyncadd [#allocation6], %s34
      %s37 = sshll.u32 [#allocation5], 4
      %s38 = int_to_ptr.vmem [resolvable:$true] %s37
      %40 = dma.hbm_to_vmem [thread:$0]  %s1, 64, %s38, [#allocation6]
    $region9: #{tpu_custom_call.1} parent=1 // pred_fallthru
      _
    // Predicated region
    $region10: #{tpu_custom_call.1} parent=1 // pred_check
      _
    $region11: #{tpu_custom_call.1} parent=1 // pred_check_branch
      %42 = sbr.rel (0) target = $region13
    $region12: #{tpu_custom_call.1} parent=1 // pred_region
      %s44 = ssub.s32 64, 64
      %45 = vsyncadd [#allocation6], %s44
      %s47 = sshll.u32 [#allocation7], 4
      %s48 = int_to_ptr.vmem [resolvable:$true] %s47
      %50 = dma.hbm_to_vmem [thread:$0]  %s2, 64, %s48, [#allocation6]
    $region13: #{tpu_custom_call.1} parent=1 // pred_fallthru
      _
    // Predicated region
    $region14: #{tpu_custom_call.1} parent=1 // pred_check
      _
    $region15: #{tpu_custom_call.1} parent=1 // pred_check_branch
      %52 = sbr.rel (0) target = $region17
    $region16: #{tpu_custom_call.1} parent=1 // pred_region
      %s54 = ssub.s32 1024, 1024
      %55 = vsyncadd [#allocation9], %s54
      %s56 = sshll.u32 [#allocation8], 4
      %s57 = int_to_ptr.vmem [resolvable:$true] %s56
      %62 = dma.hbm_to_vmem [thread:$0]  %s3, 1024, %s57, [#allocation9], 64, 64, 4
    $region17: #{tpu_custom_call.1} parent=1 // pred_fallthru
      _
    // Predicated region
    $region18: #{tpu_custom_call.1} parent=1 // pred_check
      _
    $region19: #{tpu_custom_call.1} parent=1 // pred_check_branch
      %64 = sbr.rel (0) target = $region21
    $region20: #{tpu_custom_call.1} parent=1 // pred_region
      _
    $region21: #{tpu_custom_call.1} parent=1 // pred_fallthru
      _
    // Predicated region
    $region22: #{tpu_custom_call.1} parent=1 // pred_check
      _
    $region23: #{tpu_custom_call.1} parent=1 // pred_check_branch
      %66 = sbr.rel (0) target = $region25
    $region24: #{tpu_custom_call.1} parent=1 // pred_region
      %s68 = ssub.s32 1024, 1024
      %69 = vsyncadd [#allocation9], %s68
      %s70 = sshll.u32 [#allocation10], 4
      %s71 = int_to_ptr.vmem [resolvable:$true] %s70
      %76 = dma.hbm_to_vmem [thread:$0]  %s5, 1024, %s71, [#allocation9], 64, 64, 4
    $region25: #{tpu_custom_call.1} parent=1 // pred_fallthru
      _
    // Predicated region
    $region26: #{tpu_custom_call.1} parent=1 // pred_check
      _
    $region27: #{tpu_custom_call.1} parent=1 // pred_check_branch
      %78 = sbr.rel (0) target = $region29
    $region28: #{tpu_custom_call.1} parent=1 // pred_region
      _
    $region29: #{tpu_custom_call.1} parent=1 // pred_fallthru
      _
    // Predicated region
    $region30: #{tpu_custom_call.1} parent=1 // pred_check
      _
    $region31: #{tpu_custom_call.1} parent=1 // pred_check_branch
      %80 = sbr.rel (0) target = $region33
    $region32: #{tpu_custom_call.1} parent=1 // pred_region
      %s82 = ssub.s32 1024, 1024
      %83 = vsyncadd [#allocation12], %s82
      %s84 = sshll.u32 [#allocation11], 4
      %s85 = int_to_ptr.vmem [resolvable:$true] %s84
      %90 = dma.hbm_to_vmem [thread:$0]  %s7, 1024, %s85, [#allocation12], 64, 64, 4
    $region33: #{tpu_custom_call.1} parent=1 // pred_fallthru
      _
    // Predicated region
    $region34: #{tpu_custom_call.1} parent=1 // pred_check
      _
    $region35: #{tpu_custom_call.1} parent=1 // pred_check_branch
      %92 = sbr.rel (0) target = $region37
    $region36: #{tpu_custom_call.1} parent=1 // pred_region
      _
    $region37: #{tpu_custom_call.1} parent=1 // pred_fallthru
      _
    // Predicated region
    $region38: #{tpu_custom_call.1} parent=1 // pred_check
      _
    $region39: #{tpu_custom_call.1} parent=1 // pred_check_branch
      %94 = sbr.rel (0) target = $region41
    $region40: #{tpu_custom_call.1} parent=1 // pred_region
      %s96 = ssub.s32 1024, 1024
      %97 = vsyncadd [#allocation12], %s96
      %s98 = sshll.u32 [#allocation13], 4
      %s99 = int_to_ptr.vmem [resolvable:$true] %s98
      %104 = dma.hbm_to_vmem [thread:$0]  %s9, 1024, %s99, [#allocation12], 64, 64, 4
    $region41: #{tpu_custom_call.1} parent=1 // pred_fallthru
      _
    // Predicated region
    $region42: #{tpu_custom_call.1} parent=1 // pred_check
      _
    $region43: #{tpu_custom_call.1} parent=1 // pred_check_branch
      %106 = sbr.rel (0) target = $region45
    $region44: #{tpu_custom_call.1} parent=1 // pred_region
      _
    $region45: #{tpu_custom_call.1} parent=1 // pred_fallthru
      _
    // Predicated region
    $region46: #{tpu_custom_call.1} parent=1 // pred_check
      _
    $region47: #{tpu_custom_call.1} parent=1 // pred_check_branch
      %108 = sbr.rel (0) target = $region49
    $region48: #{tpu_custom_call.1} parent=1 // pred_region
      %109 = dma.done [#allocation3], 64
    $region49: #{tpu_custom_call.1} parent=1 // pred_fallthru
      _
    // Predicated region
    $region50: #{tpu_custom_call.1} parent=1 // pred_check
      _
    $region51: #{tpu_custom_call.1} parent=1 // pred_check_branch
      %111 = sbr.rel (0) target = $region53
    $region52: #{tpu_custom_call.1} parent=1 // pred_region
      %112 = dma.done [#allocation6], 64
    $region53: #{tpu_custom_call.1} parent=1 // pred_fallthru
      _
    // Predicated region
    $region54: #{tpu_custom_call.1} parent=1 // pred_check
      _
    $region55: #{tpu_custom_call.1} parent=1 // pred_check_branch
      %114 = sbr.rel (0) target = $region57
    $region56: #{tpu_custom_call.1} parent=1 // pred_region
      %115 = dma.done [#allocation6], 64
    $region57: #{tpu_custom_call.1} parent=1 // pred_fallthru
      _
    // Predicated region
    $region58: #{tpu_custom_call.1} parent=1 // pred_check
      _
    $region59: #{tpu_custom_call.1} parent=1 // pred_check_branch
      %117 = sbr.rel (0) target = $region61
    $region60: #{tpu_custom_call.1} parent=1 // pred_region
      %118 = dma.done [#allocation9], 1024
    $region61: #{tpu_custom_call.1} parent=1 // pred_fallthru
      _
    // Predicated region
    $region62: #{tpu_custom_call.1} parent=1 // pred_check
      _
    $region63: #{tpu_custom_call.1} parent=1 // pred_check_branch
      %120 = sbr.rel (0) target = $region65
    $region64: #{tpu_custom_call.1} parent=1 // pred_region
      %121 = dma.done [#allocation9], 1024
    $region65: #{tpu_custom_call.1} parent=1 // pred_fallthru
      _
    // Predicated region
    $region66: #{tpu_custom_call.1} parent=1 // pred_check
      _
    $region67: #{tpu_custom_call.1} parent=1 // pred_check_branch
      %123 = sbr.rel (0) target = $region69
    $region68: #{tpu_custom_call.1} parent=1 // pred_region
      %124 = dma.done [#allocation12], 1024
    $region69: #{tpu_custom_call.1} parent=1 // pred_fallthru
      _
    // Predicated region
    $region70: #{tpu_custom_call.1} parent=1 // pred_check
      _
    $region71: #{tpu_custom_call.1} parent=1 // pred_check_branch
      %126 = sbr.rel (0) target = $region73
    $region72: #{tpu_custom_call.1} parent=1 // pred_region
      %127 = dma.done [#allocation12], 1024
    $region73: #{tpu_custom_call.1} parent=1 // pred_fallthru
      _
    %v129 = vld [vmem:[#allocation2] sm:$0xf]
    %v130 = vld [vmem:[#allocation8] sm:$0xf]
    %v131 = vld [vmem:[#allocation8 + $0x4] sm:$0xf]
    %v132 = vld [vmem:[#allocation8 + $0x8] sm:$0xf]
    %v133 = vld [vmem:[#allocation8 + $0xc] sm:$0xf]
    %v134 = vld [vmem:[#allocation8 + $0x10] sm:$0xf]
    %v135 = vld [vmem:[#allocation8 + $0x14] sm:$0xf]
    %v136 = vld [vmem:[#allocation8 + $0x18] sm:$0xf]
    %v137 = vld [vmem:[#allocation8 + $0x1c] sm:$0xf]
    %v138 = vld [vmem:[#allocation8 + $0x20] sm:$0xf]
    %v139 = vld [vmem:[#allocation8 + $0x24] sm:$0xf]
    %v140 = vld [vmem:[#allocation8 + $0x28] sm:$0xf]
    %v141 = vld [vmem:[#allocation8 + $0x2c] sm:$0xf]
    %v142 = vld [vmem:[#allocation8 + $0x30] sm:$0xf]
    %v143 = vld [vmem:[#allocation8 + $0x34] sm:$0xf]
    %v144 = vld [vmem:[#allocation8 + $0x38] sm:$0xf]
    %v145 = vld [vmem:[#allocation8 + $0x3c] sm:$0xf]
    %v146 = vld [vmem:[%s4] sm:$0x1]
    %v148 = vlaneseq
    %v149 = vshrl.u32 %v148, 7
    %v150 = vsub.s32 0, %v149
    %v151 = vrot.slane %v146, %v150
    %v169 = vunpack.c.l.b16 %v130
    %v170 = vunpack.c.l.b16 %v131
    %v171 = vunpack.c.l.b16 %v132
    %v172 = vunpack.c.l.b16 %v133
    %v173 = vunpack.c.l.b16 %v134
    %v174 = vunpack.c.l.b16 %v135
    %v175 = vunpack.c.l.b16 %v136
    %v176 = vunpack.c.l.b16 %v137
    %v177 = vunpack.c.l.b16 %v138
    %v178 = vunpack.c.l.b16 %v139
    %v179 = vunpack.c.l.b16 %v140
    %v180 = vunpack.c.l.b16 %v141
    %v181 = vunpack.c.l.b16 %v142
    %v182 = vunpack.c.l.b16 %v143
    %v183 = vunpack.c.l.b16 %v144
    %v184 = vunpack.c.l.b16 %v145
    %v185 = vpack.c.b16 %v170, %v169
    %v186 = vpack.c.b16 %v172, %v171
    %v187 = vpack.c.b16 %v174, %v173
    %v188 = vpack.c.b16 %v176, %v175
    %v189 = vpack.c.b16 %v178, %v177
    %v190 = vpack.c.b16 %v180, %v179
    %v191 = vpack.c.b16 %v182, %v181
    %v192 = vpack.c.b16 %v184, %v183
    %201 = vmatprep.subr.bf16.mxu0 0
    %202 = vmatpush1.bf16.msra.mxu0 %v192
    %203 = vmatprep.subr.bf16.mxu0 0
    %204 = vmatpush1.bf16.msra.mxu0 %v191
    %205 = vmatprep.subr.bf16.mxu0 0
    %206 = vmatpush1.bf16.msra.mxu0 %v190
    %207 = vmatprep.subr.bf16.mxu0 0
    %208 = vmatpush1.bf16.msra.mxu0 %v189
    %209 = vmatprep.subr.bf16.mxu0 0
    %210 = vmatpush1.bf16.msra.mxu0 %v188
    %211 = vmatprep.subr.bf16.mxu0 0
    %212 = vmatpush1.bf16.msra.mxu0 %v187
    %213 = vmatprep.subr.bf16.mxu0 0
    %214 = vmatpush1.bf16.msra.mxu0 %v186
    %215 = vmatprep.subr.bf16.mxu0 0
    %216 = vmatpush1.bf16.msra.mxu0 %v185
    %217 = vmatprep.subr.bf16.mxu0 0
    %218 = vmatpush2.bf16.msra.mxu0 0
    %219 = vmatprep.subr.bf16.mxu0 0
    %220 = vmatpush2.bf16.msra.mxu0 0
    %221 = vmatprep.subr.bf16.mxu0 0
    %222 = vmatpush2.bf16.msra.mxu0 0
    %223 = vmatprep.subr.bf16.mxu0 0
    %224 = vmatpush2.bf16.msra.mxu0 0
    %225 = vmatprep.subr.bf16.mxu0 0
    %226 = vmatpush2.bf16.msra.mxu0 0
    %227 = vmatprep.subr.bf16.mxu0 0
    %228 = vmatpush2.bf16.msra.mxu0 0
    %229 = vmatprep.subr.bf16.mxu0 0
    %230 = vmatpush2.bf16.msra.mxu0 0
    %231 = vmatprep.subr.bf16.mxu0 0
    %232 = vmatpush2.bf16.msra.mxu0 0
    %233 = vmatprep.mubr.bf16.mxu0 0
    %234 = vmatmul.mubr.bf16.gmra.mxu0 %v129
    %v235 = vpop.f32.mrf.mxu0
    %v236 = vadd.f32 %v151, %v235
    %v237 = vpop.f32.mrf.mxu0
    %v238 = vpop.f32.mrf.mxu0
    %v239 = vpop.f32.mrf.mxu0
    %240 = vdwg.mxu0
    %v241 = vtanh.pop %v236
    %v242 = vld [vmem:[#allocation5] sm:$0xf]
    %v243 = vld [vmem:[#allocation10] sm:$0xf]
    %v244 = vld [vmem:[#allocation10 + $0x4] sm:$0xf]
    %v245 = vld [vmem:[#allocation10 + $0x8] sm:$0xf]
    %v246 = vld [vmem:[#allocation10 + $0xc] sm:$0xf]
    %v247 = vld [vmem:[#allocation10 + $0x10] sm:$0xf]
    %v248 = vld [vmem:[#allocation10 + $0x14] sm:$0xf]
    %v249 = vld [vmem:[#allocation10 + $0x18] sm:$0xf]
    %v250 = vld [vmem:[#allocation10 + $0x1c] sm:$0xf]
    %v251 = vld [vmem:[#allocation10 + $0x20] sm:$0xf]
    %v252 = vld [vmem:[#allocation10 + $0x24] sm:$0xf]
    %v253 = vld [vmem:[#allocation10 + $0x28] sm:$0xf]
    %v254 = vld [vmem:[#allocation10 + $0x2c] sm:$0xf]
    %v255 = vld [vmem:[#allocation10 + $0x30] sm:$0xf]
    %v256 = vld [vmem:[#allocation10 + $0x34] sm:$0xf]
    %v257 = vld [vmem:[#allocation10 + $0x38] sm:$0xf]
    %v258 = vld [vmem:[#allocation10 + $0x3c] sm:$0xf]
    %v259 = vld [vmem:[%s6] sm:$0x1]
    %v261 = vlaneseq
    %v262 = vshrl.u32 %v261, 7
    %v263 = vsub.s32 0, %v262
    %v264 = vrot.slane %v259, %v263
    %v282 = vunpack.c.l.b16 %v243
    %v283 = vunpack.c.l.b16 %v244
    %v284 = vunpack.c.l.b16 %v245
    %v285 = vunpack.c.l.b16 %v246
    %v286 = vunpack.c.l.b16 %v247
    %v287 = vunpack.c.l.b16 %v248
    %v288 = vunpack.c.l.b16 %v249
    %v289 = vunpack.c.l.b16 %v250
    %v290 = vunpack.c.l.b16 %v251
    %v291 = vunpack.c.l.b16 %v252
    %v292 = vunpack.c.l.b16 %v253
    %v293 = vunpack.c.l.b16 %v254
    %v294 = vunpack.c.l.b16 %v255
    %v295 = vunpack.c.l.b16 %v256
    %v296 = vunpack.c.l.b16 %v257
    %v297 = vunpack.c.l.b16 %v258
    %v298 = vpack.c.b16 %v283, %v282
    %v299 = vpack.c.b16 %v285, %v284
    %v300 = vpack.c.b16 %v287, %v286
    %v301 = vpack.c.b16 %v289, %v288
    %v302 = vpack.c.b16 %v291, %v290
    %v303 = vpack.c.b16 %v293, %v292
    %v304 = vpack.c.b16 %v295, %v294
    %v305 = vpack.c.b16 %v297, %v296
    %314 = vmatprep.subr.bf16.mxu0 0
    %315 = vmatpush1.bf16.msra.mxu0 %v305
    %316 = vmatprep.subr.bf16.mxu0 0
    %317 = vmatpush1.bf16.msra.mxu0 %v304
    %318 = vmatprep.subr.bf16.mxu0 0
    %319 = vmatpush1.bf16.msra.mxu0 %v303
    %320 = vmatprep.subr.bf16.mxu0 0
    %321 = vmatpush1.bf16.msra.mxu0 %v302
    %322 = vmatprep.subr.bf16.mxu0 0
    %323 = vmatpush1.bf16.msra.mxu0 %v301
    %324 = vmatprep.subr.bf16.mxu0 0
    %325 = vmatpush1.bf16.msra.mxu0 %v300
    %326 = vmatprep.subr.bf16.mxu0 0
    %327 = vmatpush1.bf16.msra.mxu0 %v299
    %328 = vmatprep.subr.bf16.mxu0 0
    %329 = vmatpush1.bf16.msra.mxu0 %v298
    %330 = vmatprep.subr.bf16.mxu0 0
    %331 = vmatpush2.bf16.msra.mxu0 0
    %332 = vmatprep.subr.bf16.mxu0 0
    %333 = vmatpush2.bf16.msra.mxu0 0
    %334 = vmatprep.subr.bf16.mxu0 0
    %335 = vmatpush2.bf16.msra.mxu0 0
    %336 = vmatprep.subr.bf16.mxu0 0
    %337 = vmatpush2.bf16.msra.mxu0 0
    %338 = vmatprep.subr.bf16.mxu0 0
    %339 = vmatpush2.bf16.msra.mxu0 0
    %340 = vmatprep.subr.bf16.mxu0 0
    %341 = vmatpush2.bf16.msra.mxu0 0
    %342 = vmatprep.subr.bf16.mxu0 0
    %343 = vmatpush2.bf16.msra.mxu0 0
    %344 = vmatprep.subr.bf16.mxu0 0
    %345 = vmatpush2.bf16.msra.mxu0 0
    %346 = vmatprep.mubr.bf16.mxu0 0
    %347 = vmatmul.mubr.bf16.gmra.mxu0 %v242
    %v348 = vpop.f32.mrf.mxu0
    %v349 = vadd.f32 %v264, %v348
    %v350 = vpop.f32.mrf.mxu0
    %v351 = vpop.f32.mrf.mxu0
    %v352 = vpop.f32.mrf.mxu0
    %353 = vdwg.mxu0
    %v354 = vtanh.pop %v349
    %v355 = vld [vmem:[#allocation7] sm:$0xf]
    %356 = vmatprep.subr.bf16.mxu0 0
    %357 = vmatpush1.bf16.msra.mxu0 %v305
    %358 = vmatprep.subr.bf16.mxu0 0
    %359 = vmatpush1.bf16.msra.mxu0 %v304
    %360 = vmatprep.subr.bf16.mxu0 0
    %361 = vmatpush1.bf16.msra.mxu0 %v303
    %362 = vmatprep.subr.bf16.mxu0 0
    %363 = vmatpush1.bf16.msra.mxu0 %v302
    %364 = vmatprep.subr.bf16.mxu0 0
    %365 = vmatpush1.bf16.msra.mxu0 %v301
    %366 = vmatprep.subr.bf16.mxu0 0
    %367 = vmatpush1.bf16.msra.mxu0 %v300
    %368 = vmatprep.subr.bf16.mxu0 0
    %369 = vmatpush1.bf16.msra.mxu0 %v299
    %370 = vmatprep.subr.bf16.mxu0 0
    %371 = vmatpush1.bf16.msra.mxu0 %v298
    %372 = vmatprep.subr.bf16.mxu0 0
    %373 = vmatpush2.bf16.msra.mxu0 0
    %374 = vmatprep.subr.bf16.mxu0 0
    %375 = vmatpush2.bf16.msra.mxu0 0
    %376 = vmatprep.subr.bf16.mxu0 0
    %377 = vmatpush2.bf16.msra.mxu0 0
    %378 = vmatprep.subr.bf16.mxu0 0
    %379 = vmatpush2.bf16.msra.mxu0 0
    %380 = vmatprep.subr.bf16.mxu0 0
    %381 = vmatpush2.bf16.msra.mxu0 0
    %382 = vmatprep.subr.bf16.mxu0 0
    %383 = vmatpush2.bf16.msra.mxu0 0
    %384 = vmatprep.subr.bf16.mxu0 0
    %385 = vmatpush2.bf16.msra.mxu0 0
    %386 = vmatprep.subr.bf16.mxu0 0
    %387 = vmatpush2.bf16.msra.mxu0 0
    %388 = vmatprep.mubr.bf16.mxu0 0
    %389 = vmatmul.mubr.bf16.gmra.mxu0 %v355
    %v390 = vpop.f32.mrf.mxu0
    %v391 = vadd.f32 %v264, %v390
    %v392 = vpop.f32.mrf.mxu0
    %v393 = vpop.f32.mrf.mxu0
    %v394 = vpop.f32.mrf.mxu0
    %395 = vdwg.mxu0
    %v396 = vtanh.pop %v391
    %v397 = vadd.f32 %v241, %v354
    %v398 = vpack.c.bf16 %v397, %v397
    %v399 = vld [vmem:[#allocation11] sm:$0xf]
    %v400 = vld [vmem:[#allocation11 + $0x4] sm:$0xf]
    %v401 = vld [vmem:[#allocation11 + $0x8] sm:$0xf]
    %v402 = vld [vmem:[#allocation11 + $0xc] sm:$0xf]
    %v403 = vld [vmem:[#allocation11 + $0x10] sm:$0xf]
    %v404 = vld [vmem:[#allocation11 + $0x14] sm:$0xf]
    %v405 = vld [vmem:[#allocation11 + $0x18] sm:$0xf]
    %v406 = vld [vmem:[#allocation11 + $0x1c] sm:$0xf]
    %v407 = vld [vmem:[#allocation11 + $0x20] sm:$0xf]
    %v408 = vld [vmem:[#allocation11 + $0x24] sm:$0xf]
    %v409 = vld [vmem:[#allocation11 + $0x28] sm:$0xf]
    %v410 = vld [vmem:[#allocation11 + $0x2c] sm:$0xf]
    %v411 = vld [vmem:[#allocation11 + $0x30] sm:$0xf]
    %v412 = vld [vmem:[#allocation11 + $0x34] sm:$0xf]
    %v413 = vld [vmem:[#allocation11 + $0x38] sm:$0xf]
    %v414 = vld [vmem:[#allocation11 + $0x3c] sm:$0xf]
    %v415 = vld [vmem:[%s8] sm:$0x1]
    %v417 = vlaneseq
    %v418 = vshrl.u32 %v417, 7
    %v419 = vsub.s32 0, %v418
    %v420 = vrot.slane %v415, %v419
    %v438 = vunpack.c.l.b16 %v399
    %v439 = vunpack.c.l.b16 %v400
    %v440 = vunpack.c.l.b16 %v401
    %v441 = vunpack.c.l.b16 %v402
    %v442 = vunpack.c.l.b16 %v403
    %v443 = vunpack.c.l.b16 %v404
    %v444 = vunpack.c.l.b16 %v405
    %v445 = vunpack.c.l.b16 %v406
    %v446 = vunpack.c.l.b16 %v407
    %v447 = vunpack.c.l.b16 %v408
    %v448 = vunpack.c.l.b16 %v409
    %v449 = vunpack.c.l.b16 %v410
    %v450 = vunpack.c.l.b16 %v411
    %v451 = vunpack.c.l.b16 %v412
    %v452 = vunpack.c.l.b16 %v413
    %v453 = vunpack.c.l.b16 %v414
    %v454 = vpack.c.b16 %v439, %v438
    %v455 = vpack.c.b16 %v441, %v440
    %v456 = vpack.c.b16 %v443, %v442
    %v457 = vpack.c.b16 %v445, %v444
    %v458 = vpack.c.b16 %v447, %v446
    %v459 = vpack.c.b16 %v449, %v448
    %v460 = vpack.c.b16 %v451, %v450
    %v461 = vpack.c.b16 %v453, %v452
    %470 = vmatprep.subr.bf16.mxu0 0
    %471 = vmatpush1.bf16.msra.mxu0 %v461
    %472 = vmatprep.subr.bf16.mxu0 0
    %473 = vmatpush1.bf16.msra.mxu0 %v460
    %474 = vmatprep.subr.bf16.mxu0 0
    %475 = vmatpush1.bf16.msra.mxu0 %v459
    %476 = vmatprep.subr.bf16.mxu0 0
    %477 = vmatpush1.bf16.msra.mxu0 %v458
    %478 = vmatprep.subr.bf16.mxu0 0
    %479 = vmatpush1.bf16.msra.mxu0 %v457
    %480 = vmatprep.subr.bf16.mxu0 0
    %481 = vmatpush1.bf16.msra.mxu0 %v456
    %482 = vmatprep.subr.bf16.mxu0 0
    %483 = vmatpush1.bf16.msra.mxu0 %v455
    %484 = vmatprep.subr.bf16.mxu0 0
    %485 = vmatpush1.bf16.msra.mxu0 %v454
    %486 = vmatprep.subr.bf16.mxu0 0
    %487 = vmatpush2.bf16.msra.mxu0 0
    %488 = vmatprep.subr.bf16.mxu0 0
    %489 = vmatpush2.bf16.msra.mxu0 0
    %490 = vmatprep.subr.bf16.mxu0 0
    %491 = vmatpush2.bf16.msra.mxu0 0
    %492 = vmatprep.subr.bf16.mxu0 0
    %493 = vmatpush2.bf16.msra.mxu0 0
    %494 = vmatprep.subr.bf16.mxu0 0
    %495 = vmatpush2.bf16.msra.mxu0 0
    %496 = vmatprep.subr.bf16.mxu0 0
    %497 = vmatpush2.bf16.msra.mxu0 0
    %498 = vmatprep.subr.bf16.mxu0 0
    %499 = vmatpush2.bf16.msra.mxu0 0
    %500 = vmatprep.subr.bf16.mxu0 0
    %501 = vmatpush2.bf16.msra.mxu0 0
    %502 = vmatprep.mubr.bf16.mxu0 0
    %503 = vmatmul.mubr.bf16.gmra.mxu0 %v398
    %v504 = vpop.f32.mrf.mxu0
    %v505 = vadd.f32 %v420, %v504
    %v506 = vpop.f32.mrf.mxu0
    %v507 = vpop.f32.mrf.mxu0
    %v508 = vpop.f32.mrf.mxu0
    %509 = vdwg.mxu0
    %v510 = vtanh.pop %v505
    %v511 = vadd.f32 %v241, %v396
    %v512 = vpack.c.bf16 %v511, %v511
    %v513 = vld [vmem:[#allocation13] sm:$0xf]
    %v514 = vld [vmem:[#allocation13 + $0x4] sm:$0xf]
    %v515 = vld [vmem:[#allocation13 + $0x8] sm:$0xf]
    %v516 = vld [vmem:[#allocation13 + $0xc] sm:$0xf]
    %v517 = vld [vmem:[#allocation13 + $0x10] sm:$0xf]
    %v518 = vld [vmem:[#allocation13 + $0x14] sm:$0xf]
    %v519 = vld [vmem:[#allocation13 + $0x18] sm:$0xf]
    %v520 = vld [vmem:[#allocation13 + $0x1c] sm:$0xf]
    %v521 = vld [vmem:[#allocation13 + $0x20] sm:$0xf]
    %v522 = vld [vmem:[#allocation13 + $0x24] sm:$0xf]
    %v523 = vld [vmem:[#allocation13 + $0x28] sm:$0xf]
    %v524 = vld [vmem:[#allocation13 + $0x2c] sm:$0xf]
    %v525 = vld [vmem:[#allocation13 + $0x30] sm:$0xf]
    %v526 = vld [vmem:[#allocation13 + $0x34] sm:$0xf]
    %v527 = vld [vmem:[#allocation13 + $0x38] sm:$0xf]
    %v528 = vld [vmem:[#allocation13 + $0x3c] sm:$0xf]
    %v529 = vld [vmem:[%s10] sm:$0x1]
    %v531 = vlaneseq
    %v532 = vshrl.u32 %v531, 7
    %v533 = vsub.s32 0, %v532
    %v534 = vrot.slane %v529, %v533
    %v552 = vunpack.c.l.b16 %v513
    %v553 = vunpack.c.l.b16 %v514
    %v554 = vunpack.c.l.b16 %v515
    %v555 = vunpack.c.l.b16 %v516
    %v556 = vunpack.c.l.b16 %v517
    %v557 = vunpack.c.l.b16 %v518
    %v558 = vunpack.c.l.b16 %v519
    %v559 = vunpack.c.l.b16 %v520
    %v560 = vunpack.c.l.b16 %v521
    %v561 = vunpack.c.l.b16 %v522
    %v562 = vunpack.c.l.b16 %v523
    %v563 = vunpack.c.l.b16 %v524
    %v564 = vunpack.c.l.b16 %v525
    %v565 = vunpack.c.l.b16 %v526
    %v566 = vunpack.c.l.b16 %v527
    %v567 = vunpack.c.l.b16 %v528
    %v568 = vpack.c.b16 %v553, %v552
    %v569 = vpack.c.b16 %v555, %v554
    %v570 = vpack.c.b16 %v557, %v556
    %v571 = vpack.c.b16 %v559, %v558
    %v572 = vpack.c.b16 %v561, %v560
    %v573 = vpack.c.b16 %v563, %v562
    %v574 = vpack.c.b16 %v565, %v564
    %v575 = vpack.c.b16 %v567, %v566
    %584 = vmatprep.subr.bf16.mxu0 0
    %585 = vmatpush1.bf16.msra.mxu0 %v575
    %586 = vmatprep.subr.bf16.mxu0 0
    %587 = vmatpush1.bf16.msra.mxu0 %v574
    %588 = vmatprep.subr.bf16.mxu0 0
    %589 = vmatpush1.bf16.msra.mxu0 %v573
    %590 = vmatprep.subr.bf16.mxu0 0
    %591 = vmatpush1.bf16.msra.mxu0 %v572
    %592 = vmatprep.subr.bf16.mxu0 0
    %593 = vmatpush1.bf16.msra.mxu0 %v571
    %594 = vmatprep.subr.bf16.mxu0 0
    %595 = vmatpush1.bf16.msra.mxu0 %v570
    %596 = vmatprep.subr.bf16.mxu0 0
    %597 = vmatpush1.bf16.msra.mxu0 %v569
    %598 = vmatprep.subr.bf16.mxu0 0
    %599 = vmatpush1.bf16.msra.mxu0 %v568
    %600 = vmatprep.subr.bf16.mxu0 0
    %601 = vmatpush2.bf16.msra.mxu0 0
    %602 = vmatprep.subr.bf16.mxu0 0
    %603 = vmatpush2.bf16.msra.mxu0 0
    %604 = vmatprep.subr.bf16.mxu0 0
    %605 = vmatpush2.bf16.msra.mxu0 0
    %606 = vmatprep.subr.bf16.mxu0 0
    %607 = vmatpush2.bf16.msra.mxu0 0
    %608 = vmatprep.subr.bf16.mxu0 0
    %609 = vmatpush2.bf16.msra.mxu0 0
    %610 = vmatprep.subr.bf16.mxu0 0
    %611 = vmatpush2.bf16.msra.mxu0 0
    %612 = vmatprep.subr.bf16.mxu0 0
    %613 = vmatpush2.bf16.msra.mxu0 0
    %614 = vmatprep.subr.bf16.mxu0 0
    %615 = vmatpush2.bf16.msra.mxu0 0
    %616 = vmatprep.mubr.bf16.mxu0 0
    %617 = vmatmul.mubr.bf16.gmra.mxu0 %v512
    %v618 = vpop.f32.mrf.mxu0
    %v619 = vadd.f32 %v534, %v618
    %v620 = vpop.f32.mrf.mxu0
    %v621 = vpop.f32.mrf.mxu0
    %v622 = vpop.f32.mrf.mxu0
    %623 = vdwg.mxu0
    %v624 = vtanh.pop %v619
    %625 = vst [vmem:[#allocation14] sm:$0xff] %v510
    %626 = vst [vmem:[#allocation14 + $0x8] sm:$0xff] %v624
    // Predicated region
    $region74: #{tpu_custom_call.1} parent=1 // pred_check
      _
    $region75: #{tpu_custom_call.1} parent=1 // pred_check_branch
      %628 = sbr.rel (0) target = $region77
    $region76: #{tpu_custom_call.1} parent=1 // pred_region
      %s630 = ssub.s32 256, 256
      %631 = vsyncadd [#allocation4], %s630
      %s633 = sshll.u32 [#allocation14], 4
      %s634 = int_to_ptr.vmem [resolvable:$true] %s633
      %636 = dma.vmem_to_hbm [thread:$0]  %s634, 256, %s11, [#allocation4]
    $region77: #{tpu_custom_call.1} parent=1 // pred_fallthru
      _
    // Predicated region
    $region78: #{tpu_custom_call.1} parent=1 // pred_check
      _
    $region79: #{tpu_custom_call.1} parent=1 // pred_check_branch
      %638 = sbr.rel (0) target = $region81
    $region80: #{tpu_custom_call.1} parent=1 // pred_region
      %639 = dma.done [#allocation4], 256
    $region81: #{tpu_custom_call.1} parent=1 // pred_fallthru
      _
    %640 = vsyncpa [#allocation3], 1
    %641 = vsyncpa [#allocation6], 1
    %642 = vsyncpa [#allocation9], 1
    %643 = vsyncpa [#allocation12], 1
    %644 = vsyncpa [#allocation4], 1

</llo_original>
